<compile_context>
chip_gen: v7x
topology: tpu7x:2x2x1
jax: 0.10.0
libtpu: 0.0.40
codegen_flags: <defaults>
</compile_context>

<pallas_src>
import jax
import jax.numpy as jnp
from jax.experimental import pallas as pl
from jax.experimental.pallas import tpu as pltpu

_LANE = 128
_TARGET_STEP_BYTES = 2 * 1024 * 1024   # ~2 MiB of x+out HBM traffic per grid step
_FIXED_RESERVE = 2 * 1024 * 1024       # Mosaic internal scratch / misc headroom


def _outconv_pixel_kernel(x_ref, w_ref, b_ref, o_ref):
    # x_ref: (C_in, t_hw) pixels lane-dense; w_ref: (C_out, C_in)
    # b_ref: (C_out, 1) float32;             o_ref: (C_out, t_hw)
    acc = jnp.dot(w_ref[...], x_ref[...], preferred_element_type=jnp.float32)
    o_ref[...] = (acc + b_ref[...]).astype(o_ref.dtype)


def _outconv_batched_kernel(x_ref, w_ref, b_ref, o_ref):
    # x_ref: (bn, C_in, HW); w_ref: (C_out, C_in); b_ref: (C_out, 1) f32
    # o_ref: (bn, C_out, HW)
    acc = jnp.einsum("oc,bcp->bop", w_ref[...], x_ref[...],
                     preferred_element_type=jnp.float32)
    o_ref[...] = (acc + b_ref[...][None]).astype(o_ref.dtype)


def _vmem_budget_bytes():
    """Generation-aware VMEM budget for the pipelined blocks."""
    cap = 128 * 1024 * 1024
    try:
        cap = int(pltpu.get_tpu_info().vmem_capacity_bytes)
    except Exception:
        pass
    # v7x-class parts expose only 64 MiB of VMEM per core; v5e/v6e have 128 MiB.
    budget = 40 * 1024 * 1024 if cap <= 64 * 1024 * 1024 else 64 * 1024 * 1024
    return min(budget, max(cap * 5 // 8, 8 * 1024 * 1024))


def _block_budget_bytes(c_in, c_out, itemsize, vmem_budget):
    """VMEM left for the pipelined x/out blocks after the resident params."""
    # Conservatively assume the (constant-index) weight/bias blocks end up
    # double-buffered, plus a fixed reserve for Mosaic internal scratch.
    param_bytes = 2 * (c_out * c_in * itemsize + c_out * 4)
    return max(vmem_budget - param_bytes - _FIXED_RESERVE, 1024 * 1024)


def _pick_pixel_tile(hw, c_in, c_out, itemsize, vmem_budget):
    """Lane-axis (pixel) tile: sized by HBM bytes/step, capped by VMEM."""
    budget = _block_budget_bytes(c_in, c_out, itemsize, vmem_budget)
    # Per-pixel VMEM: double-buffered x and out blocks + the f32 accumulator.
    per_pixel_vmem = 2 * (c_in + c_out) * itemsize + c_out * 4
    max_pixels_vmem = max(_LANE, budget // max(per_pixel_vmem, 1))
    # Per-pixel HBM traffic: one x read + one out write.
    per_pixel_hbm = max((c_in + c_out) * itemsize, 1)
    target_pixels = max(_LANE, _TARGET_STEP_BYTES // per_pixel_hbm)
    t = min(max_pixels_vmem, target_pixels)
    t = max(_LANE, (t // _LANE) * _LANE)
    if hw <= t:
        return hw
    return t


def _param_spec(shape, index_map, pipeline_mode):
    if pipeline_mode is None:
        return pl.BlockSpec(shape, index_map)
    return pl.BlockSpec(shape, index_map, pipeline_mode=pipeline_mode)


def outconv_pallas(x_nchw, weight, bias, *, pixel_tile=None):
    """1x1 conv (nn.Conv2d(in_ch, out_ch, 1)) forward.

    x_nchw : (N, C_in, H, W)
    weight : (C_out, C_in, 1, 1)   (PyTorch conv weight layout)
    bias   : (C_out,)
    returns: (N, C_out, H, W)
    """
    N, C_in, H, W = x_nchw.shape
    C_out = weight.shape[0]
    HW = H * W

    # Channels-first: pure reshapes, no NCHW<->NHWC transposes in HBM.
    x = x_nchw.reshape(N, C_in, HW)
    w = weight.reshape(C_out, C_in).astype(x.dtype)
    b = bias.reshape(C_out, 1).astype(jnp.float32)   # keep bias in f32

    itemsize = jnp.dtype(x.dtype).itemsize
    vmem_budget = _vmem_budget_bytes()
    vmem_limit = vmem_budget + 8 * 1024 * 1024       # slightly above the budget

    flops = 2 * N * HW * C_in * C_out
    bytes_accessed = (N * HW * (C_in + C_out) + C_out * C_in) * itemsize + C_out * 4
    cost = pl.CostEstimate(flops=flops, transcendentals=0,
                           bytes_accessed=bytes_accessed)

    per_image_hbm = HW * (C_in + C_out) * itemsize
    use_batched = pixel_tile is None and per_image_hbm <= _TARGET_STEP_BYTES

    if use_batched:
        # Small feature maps: amortize several whole images per grid step.
        bn = max(1, min(N, _TARGET_STEP_BYTES // max(per_image_hbm, 1)))
        per_image_vmem = HW * (2 * (C_in + C_out) * itemsize + C_out * 4)
        vmem_cap = _block_budget_bytes(C_in, C_out, itemsize, vmem_budget)
        bn = max(1, min(bn, vmem_cap // max(per_image_vmem, 1)))
        if N > 1:
            # Keep >=2 grid steps so both v7x TensorCores get work.
            bn = min(bn, pl.cdiv(N, 2))
        bn = min(bn, N)
        grid = (pl.cdiv(N, bn),)
        dims = ("parallel",)
        kernel = _outconv_batched_kernel

        def build_specs(param_mode):
            in_specs = [
                pl.BlockSpec((bn, C_in, HW), lambda i: (i, 0, 0)),
                _param_spec((C_out, C_in), lambda i: (0, 0), param_mode),
                _param_spec((C_out, 1), lambda i: (0, 0), param_mode),
            ]
            out_specs = pl.BlockSpec((bn, C_out, HW), lambda i: (i, 0, 0))
            return in_specs, out_specs
    else:
        # Large feature maps: tile the pixel (lane) axis per image.
        if pixel_tile is not None:
            if pixel_tile >= HW or HW <= _LANE:
                t_hw = HW
            else:
                t_hw = min(HW, max(_LANE, (min(pixel_tile, HW) // _LANE) * _LANE))
        else:
            t_hw = _pick_pixel_tile(HW, C_in, C_out, itemsize, vmem_budget)
            if N == 1 and t_hw >= HW and HW > _LANE:
                # Split single-image work into >=2 tiles for v7x's two cores.
                t_hw = min(HW, pl.cdiv(pl.cdiv(HW, 2), _LANE) * _LANE)
        n_tiles = pl.cdiv(HW, t_hw)
        grid = (N, n_tiles)
        dims = ("parallel", "parallel")
        kernel = _outconv_pixel_kernel

        def build_specs(param_mode):
            in_specs = [
                pl.BlockSpec((None, C_in, t_hw), lambda n, j: (n, 0, j)),
                _param_spec((C_out, C_in), lambda n, j: (0, 0), param_mode),
                _param_spec((C_out, 1), lambda n, j: (0, 0), param_mode),
            ]
            out_specs = pl.BlockSpec((None, C_out, t_hw), lambda n, j: (n, 0, j))
            return in_specs, out_specs

    def run(param_mode):
        in_specs, out_specs = build_specs(param_mode)
        return pl.pallas_call(
            kernel,
            out_shape=jax.ShapeDtypeStruct((N, C_out, HW), x.dtype),
            grid_spec=pltpu.PrefetchScalarGridSpec(
                num_scalar_prefetch=0,
                grid=grid,
                in_specs=in_specs,
                out_specs=out_specs,
            ),
            compiler_params=pltpu.CompilerParams(
                dimension_semantics=dims,
                vmem_limit_bytes=vmem_limit,
            ),
            cost_estimate=cost,
        )(x, w, b)

    try:
        # Weight/bias block indices are constant across the grid: single-buffer
        # them and reclaim the VMEM for larger pixel/batch tiles.
        out = run(pl.Buffered(1))
    except Exception:
        out = run(None)   # fallback if pipeline_mode/Buffered(1) is unsupported

    return out.reshape(N, C_out, H, W)


if __name__ == "__main__":
    key = jax.random.PRNGKey(0)
    kx, kw, kb = jax.random.split(key, 3)

    N, C_in, H, W = 2, 4, 16, 16
    C_out = 3

    x = jax.random.normal(kx, (N, C_in, H, W), dtype=jnp.float32)
    # Deterministic synthetic parameters (shapes match nn.Conv2d(in_ch, out_ch, 1)).
    weight = jax.random.normal(kw, (C_out, C_in, 1, 1), dtype=jnp.float32) * 0.1
    bias = jax.random.normal(kb, (C_out,), dtype=jnp.float32) * 0.1

    out = jax.block_until_ready(outconv_pallas(x, weight, bias))

    # Correctness check vs plain-JAX reference of the 1x1 conv.
    ref = (jnp.einsum("nchw,oc->nohw", x, weight.reshape(C_out, C_in))
           + bias[None, :, None, None])
    assert out.shape == (N, C_out, H, W)
    assert jnp.allclose(out, ref, atol=1e-5, rtol=1e-5)

    print("KERNEL_OK")
</pallas_src>

<mosaic_0001>
module attributes {stable_mosaic.version = 11 : i64} {
  func.func @_outconv_batched_kernel(%arg0: i32, %arg1: memref<1x4x256xf32, #tpu.memory_space<vmem>>, %arg2: memref<3x4xf32, #tpu.memory_space<vmem>>, %arg3: memref<3x1xf32, #tpu.memory_space<vmem>>, %arg4: memref<1x3x256xf32, #tpu.memory_space<vmem>>) attributes {dimension_semantics = [#tpu.dimension_semantics<parallel>], iteration_bounds = array<i64: 2>, scalar_prefetch = 0 : i64, scratch_operands = 0 : i64, tpu.core_type = #tpu.core_type<tc>, window_params = [{transform_indices = @transform_0, window_bounds = array<i64: 1, 4, 256>}, {pipeline_mode = #tpu.pipeline_mode<synchronous>, transform_indices = @transform_1, window_bounds = array<i64: 3, 4>}, {pipeline_mode = #tpu.pipeline_mode<synchronous>, transform_indices = @transform_2, window_bounds = array<i64: 3, 1>}, {transform_indices = @transform_3, window_bounds = array<i64: 1, 3, 256>}]} {
    %c0 = arith.constant 0 : index
    %c0_0 = arith.constant 0 : index
    %0 = vector.load %arg2[%c0, %c0_0] : memref<3x4xf32, #tpu.memory_space<vmem>>, vector<3x4xf32>
    %c0_1 = arith.constant 0 : index
    %c0_2 = arith.constant 0 : index
    %c0_3 = arith.constant 0 : index
    %1 = vector.load %arg1[%c0_1, %c0_2, %c0_3] : memref<1x4x256xf32, #tpu.memory_space<vmem>>, vector<1x4x256xf32>
    "tpu.trace_start"() <{level = 10 : i32, message = "oc,bcp->bop"}> : () -> ()
    %cst = arith.constant dense<0.000000e+00> : vector<1x256x3xf32>
    %2 = tpu.matmul %1, %0, %cst {dimension_numbers = #tpu.dot_dimension_numbers<[1], [1], [0, 2], [0], [0, 0, 0, 2, 1, 0], [], []>} : vector<1x4x256xf32>, vector<3x4xf32>, vector<1x256x3xf32> -> vector<1x256x3xf32>
    %3 = tpu.transpose %2, [0, 2, 1] : vector<1x256x3xf32> -> vector<1x3x256xf32>
    "tpu.trace_stop"() : () -> ()
    %c0_4 = arith.constant 0 : index
    %c0_5 = arith.constant 0 : index
    %4 = vector.load %arg3[%c0_4, %c0_5] : memref<3x1xf32, #tpu.memory_space<vmem>>, vector<3x1xf32>
    %5 = vector.shape_cast %4 : vector<3x1xf32> to vector<1x3x1xf32>
    %6 = vector.broadcast %5 : vector<1x3x1xf32> to vector<1x3x256xf32>
    %7 = arith.addf %3, %6 : vector<1x3x256xf32>
    %c0_6 = arith.constant 0 : index
    %c0_7 = arith.constant 0 : index
    %c0_8 = arith.constant 0 : index
    %8 = vector.load %arg4[%c0_6, %c0_7, %c0_8] : memref<1x3x256xf32, #tpu.memory_space<vmem>>, vector<1x3x256xf32>
    tpu.vector_store %arg4[%c0_6, %c0_7, %c0_8], %7 {strides = array<i32>} : memref<1x3x256xf32, #tpu.memory_space<vmem>>, vector<1x3x256xf32>,
    return
  }
  func.func @transform_0(%arg0: i32) -> (i32, i32, i32) {
    %c0_i32 = arith.constant 0 : i32
    %c0_i32_0 = arith.constant 0 : i32
    %c0_i32_1 = arith.constant 0 : i32
    return %arg0, %c0_i32, %c0_i32_0 : i32, i32, i32
  }
  func.func @transform_1(%arg0: i32) -> (i32, i32) {
    %c0_i32 = arith.constant 0 : i32
    %c0_i32_0 = arith.constant 0 : i32
    %c0_i32_1 = arith.constant 0 : i32
    return %c0_i32, %c0_i32_0 : i32, i32
  }
  func.func @transform_2(%arg0: i32) -> (i32, i32) {
    %c0_i32 = arith.constant 0 : i32
    %c0_i32_0 = arith.constant 0 : i32
    %c0_i32_1 = arith.constant 0 : i32
    return %c0_i32, %c0_i32_0 : i32, i32
  }
  func.func @transform_3(%arg0: i32) -> (i32, i32, i32) {
    %c0_i32 = arith.constant 0 : i32
    %c0_i32_0 = arith.constant 0 : i32
    %c0_i32_1 = arith.constant 0 : i32
    return %arg0, %c0_i32, %c0_i32_0 : i32, i32, i32
  }
}

module attributes {stable_mosaic.version = 11 : i64} {
  func.func @_outconv_batched_kernel(%arg0: i32, %arg1: memref<1x4x256xf32, #tpu.memory_space<vmem>>, %arg2: memref<3x4xf32, #tpu.memory_space<vmem>>, %arg3: memref<3x1xf32, #tpu.memory_space<vmem>>, %arg4: memref<1x3x256xf32, #tpu.memory_space<vmem>>) attributes {dimension_semantics = [#tpu.dimension_semantics<parallel>], iteration_bounds = array<i64: 2>, scalar_prefetch = 0 : i64, scratch_operands = 0 : i64, tpu.core_type = #tpu.core_type<tc>, window_params = [{transform_indices = @transform_0, window_bounds = array<i64: 1, 4, 256>}, {pipeline_mode = #tpu.pipeline_mode<synchronous>, transform_indices = @transform_1, window_bounds = array<i64: 3, 4>}, {pipeline_mode = #tpu.pipeline_mode<synchronous>, transform_indices = @transform_2, window_bounds = array<i64: 3, 1>}, {transform_indices = @transform_3, window_bounds = array<i64: 1, 3, 256>}]} {
    %c0 = arith.constant 0 : index
    %c0_0 = arith.constant 0 : index
    %0 = vector.load %arg2[%c0, %c0_0] : memref<3x4xf32, #tpu.memory_space<vmem>>, vector<3x4xf32>
    %c0_1 = arith.constant 0 : index
    %c0_2 = arith.constant 0 : index
    %c0_3 = arith.constant 0 : index
    %1 = vector.load %arg1[%c0_1, %c0_2, %c0_3] : memref<1x4x256xf32, #tpu.memory_space<vmem>>, vector<1x4x256xf32>
    "tpu.trace_start"() <{level = 10 : i32, message = "oc,bcp->bop"}> : () -> ()
    %cst = arith.constant dense<0.000000e+00> : vector<1x256x3xf32>
    %2 = tpu.matmul %1, %0, %cst {dimension_numbers = #tpu.dot_dimension_numbers<[1], [1], [0, 2], [0], [0, 0, 0, 2, 1, 0], [], []>} : vector<1x4x256xf32>, vector<3x4xf32>, vector<1x256x3xf32> -> vector<1x256x3xf32>
    %3 = tpu.transpose %2, [0, 2, 1] : vector<1x256x3xf32> -> vector<1x3x256xf32>
    "tpu.trace_stop"() : () -> ()
    %c0_4 = arith.constant 0 : index
    %c0_5 = arith.constant 0 : index
    %4 = vector.load %arg3[%c0_4, %c0_5] : memref<3x1xf32, #tpu.memory_space<vmem>>, vector<3x1xf32>
    %5 = vector.shape_cast %4 : vector<3x1xf32> to vector<1x3x1xf32>
    %6 = vector.broadcast %5 : vector<1x3x1xf32> to vector<1x3x256xf32>
    %7 = arith.addf %3, %6 : vector<1x3x256xf32>
    %c0_6 = arith.constant 0 : index
    %c0_7 = arith.constant 0 : index
    %c0_8 = arith.constant 0 : index
    %8 = vector.load %arg4[%c0_6, %c0_7, %c0_8] : memref<1x3x256xf32, #tpu.memory_space<vmem>>, vector<1x3x256xf32>
    tpu.vector_store %arg4[%c0_6, %c0_7, %c0_8], %7 {strides = array<i32>} : memref<1x3x256xf32, #tpu.memory_space<vmem>>, vector<1x3x256xf32>,
    return
  }
  func.func @transform_0(%arg0: i32) -> (i32, i32, i32) {
    %c0_i32 = arith.constant 0 : i32
    %c0_i32_0 = arith.constant 0 : i32
    %c0_i32_1 = arith.constant 0 : i32
    return %arg0, %c0_i32, %c0_i32_0 : i32, i32, i32
  }
  func.func @transform_1(%arg0: i32) -> (i32, i32) {
    %c0_i32 = arith.constant 0 : i32
    %c0_i32_0 = arith.constant 0 : i32
    %c0_i32_1 = arith.constant 0 : i32
    return %c0_i32, %c0_i32_0 : i32, i32
  }
  func.func @transform_2(%arg0: i32) -> (i32, i32) {
    %c0_i32 = arith.constant 0 : i32
    %c0_i32_0 = arith.constant 0 : i32
    %c0_i32_1 = arith.constant 0 : i32
    return %c0_i32, %c0_i32_0 : i32, i32
  }
  func.func @transform_3(%arg0: i32) -> (i32, i32, i32) {
    %c0_i32 = arith.constant 0 : i32
    %c0_i32_0 = arith.constant 0 : i32
    %c0_i32_1 = arith.constant 0 : i32
    return %arg0, %c0_i32, %c0_i32_0 : i32, i32, i32
  }
}

</mosaic_0001>

<llo_original>
// kernel: tpu_custom_call.1
$region0: #{tpu_custom_call.1}
  #allocation0 [shape = 'u32[]', space=smem, size = 0x4, offset = 0x4, fixed_abs, tag = 'smem constant byte address 0x4 - core index']
  #allocation1 [shape = 'u32[144,128]{1,0:T(1,128)}', space=vmem, size = 0x12000, scoped, tag = 'internal scratch']
  %s0 = inlined_call_operand.hbm [shape: f32[2,4,256], index: 0, kind: input, shape index: {}]
  %s1 = inlined_call_operand.hbm [shape: f32[3,4], index: 1, kind: input, shape index: {}]
  %s2 = inlined_call_operand.hbm [shape: f32[3,1], index: 2, kind: input, shape index: {}]
  %s3 = inlined_call_operand.hbm [shape: f32[2,3,256], index: 3, kind: output, shape index: {}]
  %s4 = sld [smem:[#allocation0]]
  $region57: #{tpu_custom_call.1} parent=0
    _
  %s6 = ssub.s32 1, %s4
  %s7 = scalar_select 0, %s6, %s4
  $region1: #{tpu_custom_call.1} parent=0
    #allocation2 [shape = 'u8[8192]{0}', space=vmem, size = 0x2000, scoped, tag = 'input window, operand 0']
    #allocation3 [shape = 's32[2]{0}', space=sflag, size = 0x8, scoped, tag = 'scoped memory for tpu_custom_call.1']
    #allocation4 [shape = 's32[2]{0}', space=sflag, size = 0x8, scoped, tag = 'scoped memory for tpu_custom_call.1']
    #allocation5 [shape = 'u8[2048]{0}', space=vmem, size = 0x800, scoped, tag = 'input window, operand 1, single buffered']
    #allocation6 [shape = 's32[1]{0}', space=sflag, size = 0x4, scoped, tag = 'scoped memory for tpu_custom_call.1']
    #allocation7 [shape = 'u8[2048]{0}', space=vmem, size = 0x800, scoped, tag = 'input window, operand 2, single buffered']
    #allocation8 [shape = 'u8[8192]{0}', space=vmem, size = 0x2000, scoped, tag = 'output window, operand 0']
    %8 = vsyncpa [#allocation3], 0
    %s9 = scalar_lea.sflag [#allocation3], 1
    %10 = vsyncpa %s9, 0
    %11 = vsyncpa [#allocation6], 0
    %12 = vsyncpa [#allocation4], 0
    %s13 = scalar_lea.sflag [#allocation4], 1
    %14 = vsyncpa %s13, 0
    loop: start=0, step=1, limit=4
    $region2: #{tpu_custom_call.1} parent=1 // loop_pre_header
      _
    $region3: #{tpu_custom_call.1} parent=1 // loop_header
      %s16 = sphi 0, %s20
      %p17 = scmp.ge.s32.totalorder %s16, 4
      %s26 = sphi 0, %s28
      %s29 = sphi 0, %s26
      %s30 = sphi 0, %s29
      %s46 = sphi 0, %s30
      %s50 = sphi 0, %s50
      %s52 = sphi 0, %s50
      %s53 = sphi 0, %s52
      %s67 = sphi 0, %s53
      %s71 = sphi 0, %s71
      %s73 = sphi 0, %s71
      %s74 = sphi 0, %s73
      %s88 = sphi 0, %s74
      %s94 = sphi 0, %s96
      %s97 = sphi 0, %s94
      %s98 = sphi 0, %s97
      %s114 = sphi 0, %s98
    $region4: #{tpu_custom_call.1} parent=1 // loop_header_branch
      %19 = sbr.rel (%p17) target = $region8
    $region5: #{tpu_custom_call.1} parent=1 // loop_body
      %s21 = ssub.s32 %s16, 1
      %s22 = ssub.s32 %s16, 2
      %s23 = sadd.s32 %s16, 1
      %s24 = ssub.s32 %s16, %s23
      %p25 = scmp.eq.s32.totalorder %s24, 0
      %s27 = sadd.s32 %s26, 1
      %s28 = scalar_select %p25, %s26, %s27
      %p31 = pneg %p25
      %p32 = scmp.eq.s32.totalorder %s16, 1
      %p33 = por %p31, %p32
      %p34 = scmp.ne.s32.totalorder %s26, %s29
      %p35 = scmp.eq.s32.totalorder %s16, 0
      %p36 = por %p34, %p35
      %p37 = scmp.ne.s32.totalorder %s26, %s29
      %p38 = scmp.eq.s32.totalorder %s21, 1
      %p39 = por %p37, %p38
      %p40 = scmp.ne.s32.totalorder %s29, %s30
      %p41 = scmp.eq.s32.totalorder %s21, 0
      %p42 = por %p40, %p41
      %p43 = scmp.ne.s32.totalorder %s29, %s30
      %p44 = scmp.eq.s32.totalorder %s22, 1
      %p45 = por %p43, %p44
      %p47 = scmp.ne.s32.totalorder %s30, %s46
      %p48 = scmp.eq.s32.totalorder %s22, 0
      %p49 = por %p47, %p48
      %s51 = sadd.s32 %s50, 1
      %p54 = scmp.eq.s32.totalorder %s16, 1
      %p55 = scmp.ne.s32.totalorder %s50, %s52
      %p56 = scmp.eq.s32.totalorder %s16, 0
      %p57 = por %p55, %p56
      %p58 = scmp.ne.s32.totalorder %s50, %s52
      %p59 = scmp.eq.s32.totalorder %s21, 1
      %p60 = por %p58, %p59
      %p61 = scmp.ne.s32.totalorder %s52, %s53
      %p62 = scmp.eq.s32.totalorder %s21, 0
      %p63 = por %p61, %p62
      %p64 = scmp.ne.s32.totalorder %s52, %s53
      %p65 = scmp.eq.s32.totalorder %s22, 1
      %p66 = por %p64, %p65
      %p68 = scmp.ne.s32.totalorder %s53, %s67
      %p69 = scmp.eq.s32.totalorder %s22, 0
      %p70 = por %p68, %p69
      %s72 = sadd.s32 %s71, 1
      %p75 = scmp.eq.s32.totalorder %s16, 1
      %p76 = scmp.ne.s32.totalorder %s71, %s73
      %p77 = scmp.eq.s32.totalorder %s16, 0
      %p78 = por %p76, %p77
      %p79 = scmp.ne.s32.totalorder %s71, %s73
      %p80 = scmp.eq.s32.totalorder %s21, 1
      %p81 = por %p79, %p80
      %p82 = scmp.ne.s32.totalorder %s73, %s74
      %p83 = scmp.eq.s32.totalorder %s21, 0
      %p84 = por %p82, %p83
      %p85 = scmp.ne.s32.totalorder %s73, %s74
      %p86 = scmp.eq.s32.totalorder %s22, 1
      %p87 = por %p85, %p86
      %p89 = scmp.ne.s32.totalorder %s74, %s88
      %p90 = scmp.eq.s32.totalorder %s22, 0
      %p91 = por %p89, %p90
      %s92 = ssub.s32 %s16, %s23
      %p93 = scmp.eq.s32.totalorder %s92, 0
      %s95 = sadd.s32 %s94, 1
      %s96 = scalar_select %p93, %s94, %s95
      %p99 = pneg %p93
      %p100 = scmp.eq.s32.totalorder %s16, 1
      %p101 = por %p99, %p100
      %p102 = scmp.ne.s32.totalorder %s94, %s97
      %p103 = scmp.eq.s32.totalorder %s16, 0
      %p104 = por %p102, %p103
      %p105 = scmp.ne.s32.totalorder %s94, %s97
      %p106 = scmp.eq.s32.totalorder %s21, 1
      %p107 = por %p105, %p106
      %p108 = scmp.ne.s32.totalorder %s97, %s98
      %p109 = scmp.eq.s32.totalorder %s21, 0
      %p110 = por %p108, %p109
      %p111 = scmp.ne.s32.totalorder %s97, %s98
      %p112 = scmp.eq.s32.totalorder %s22, 1
      %p113 = por %p111, %p112
      %p115 = scmp.ne.s32.totalorder %s98, %s114
      %p116 = scmp.eq.s32.totalorder %s22, 0
      %p117 = por %p115, %p116
      %p118 = scmp.le.s32.totalorder 1, %s16
      %p119 = scmp.lt.s32.totalorder %s16, 3
      %p120 = pnand %p118, %p119
      %p121 = pneg %p120
      // Predicated region
      $region9: #{tpu_custom_call.1} parent=5 // pred_check
        _
      $region10: #{tpu_custom_call.1} parent=5 // pred_check_branch
        %123 = sbr.rel (%p120) target = $region12
      $region11: #{tpu_custom_call.1} parent=5 // pred_region
        %s124 = ssub.s32 %s16, 1
        // Predicated region
        $region13: #{tpu_custom_call.1} parent=11 // pred_check
          %p125 = pneg %p63
        $region14: #{tpu_custom_call.1} parent=11 // pred_check_branch
          %127 = sbr.rel (%p125) target = $region16
        $region15: #{tpu_custom_call.1} parent=11 // pred_region
          %s129 = ssub.s32 64, 64
          %130 = vsyncadd [#allocation6], %s129
          %s132 = sshll.u32 [#allocation5], 4
          %s133 = int_to_ptr.vmem [resolvable:$true] %s132
          %135 = dma.hbm_to_vmem [thread:$0]  %s1, 64, %s133, [#allocation6]
        $region16: #{tpu_custom_call.1} parent=11 // pred_fallthru
          _
        // Predicated region
        $region17: #{tpu_custom_call.1} parent=11 // pred_check
          %p136 = pneg %p84
        $region18: #{tpu_custom_call.1} parent=11 // pred_check_branch
          %138 = sbr.rel (%p136) target = $region20
        $region19: #{tpu_custom_call.1} parent=11 // pred_region
          %s140 = ssub.s32 64, 64
          %141 = vsyncadd [#allocation6], %s140
          %s143 = sshll.u32 [#allocation7], 4
          %s144 = int_to_ptr.vmem [resolvable:$true] %s143
          %146 = dma.hbm_to_vmem [thread:$0]  %s2, 64, %s144, [#allocation6]
        $region20: #{tpu_custom_call.1} parent=11 // pred_fallthru
          _
      $region12: #{tpu_custom_call.1} parent=5 // pred_fallthru
        _
      %p147 = scmp.lt.s32.totalorder %s16, 2
      // Predicated region
      $region21: #{tpu_custom_call.1} parent=5 // pred_check
        %p148 = pneg %p147
      $region22: #{tpu_custom_call.1} parent=5 // pred_check_branch
        %150 = sbr.rel (%p148) target = $region24
      $region23: #{tpu_custom_call.1} parent=5 // pred_region
        // Predicated region
        $region25: #{tpu_custom_call.1} parent=23 // pred_check
          %p151 = pneg %p36
        $region26: #{tpu_custom_call.1} parent=23 // pred_check_branch
          %153 = sbr.rel (%p151) target = $region28
        $region27: #{tpu_custom_call.1} parent=23 // pred_region
          %s154 = sand.u32 %s26, 1
          %s155 = scalar_lea.sflag [#allocation3], %s154
          %s156 = sand.u32 %s26, 1
          %s157 = smul.addr %s156, 8
          %s158 = scalar_lea.vmem [#allocation2], %s157
          %s160 = ssub.s32 128, 128
          %161 = vsyncadd %s155, %s160
          %s162 = smul.addr %s16, 2
          %s163 = smul.addr %s162, 64
          %s164 = scalar_lea.hbm %s0, %s163
          %s166 = sshll.u32 %s158, 4
          %s167 = int_to_ptr.vmem [resolvable:$true] %s166
          %169 = dma.hbm_to_vmem [thread:$0]  %s164, 128, %s167, %s155
        $region28: #{tpu_custom_call.1} parent=23 // pred_fallthru
          _
      $region24: #{tpu_custom_call.1} parent=5 // pred_fallthru
        _
      %p170 = scmp.le.s32.totalorder 1, %s16
      %p171 = scmp.lt.s32.totalorder %s16, 3
      %p172 = pnand %p170, %p171
      %p173 = pneg %p172
      // Predicated region
      $region29: #{tpu_custom_call.1} parent=5 // pred_check
        _
      $region30: #{tpu_custom_call.1} parent=5 // pred_check_branch
        %175 = sbr.rel (%p172) target = $region32
      $region31: #{tpu_custom_call.1} parent=5 // pred_region
        %s176 = ssub.s32 %s16, 1
        %s177 = sand.u32 %s29, 1
        %s178 = scalar_lea.sflag [#allocation3], %s177
        %s179 = sand.u32 %s29, 1
        %s180 = smul.addr %s179, 8
        %s181 = scalar_lea.vmem [#allocation2], %s180
        // Predicated region
        $region33: #{tpu_custom_call.1} parent=31 // pred_check
          %p182 = pneg %p42
        $region34: #{tpu_custom_call.1} parent=31 // pred_check_branch
          %184 = sbr.rel (%p182) target = $region36
        $region35: #{tpu_custom_call.1} parent=31 // pred_region
          %185 = dma.done %s178, 128
        $region36: #{tpu_custom_call.1} parent=31 // pred_fallthru
          _
        // Predicated region
        $region37: #{tpu_custom_call.1} parent=31 // pred_check
          %p186 = pneg %p63
        $region38: #{tpu_custom_call.1} parent=31 // pred_check_branch
          %188 = sbr.rel (%p186) target = $region40
        $region39: #{tpu_custom_call.1} parent=31 // pred_region
          %189 = dma.done [#allocation6], 64
        $region40: #{tpu_custom_call.1} parent=31 // pred_fallthru
          _
        // Predicated region
        $region41: #{tpu_custom_call.1} parent=31 // pred_check
          %p190 = pneg %p84
        $region42: #{tpu_custom_call.1} parent=31 // pred_check_branch
          %192 = sbr.rel (%p190) target = $region44
        $region43: #{tpu_custom_call.1} parent=31 // pred_region
          %193 = dma.done [#allocation6], 64
        $region44: #{tpu_custom_call.1} parent=31 // pred_fallthru
          _
        %s194 = sand.u32 %s29, 1
        %s195 = scalar_lea.sflag [#allocation3], %s194
        %s196 = sand.u32 %s29, 1
        %s197 = smul.addr %s196, 8
        %s198 = scalar_lea.vmem [#allocation2], %s197
        %p199 = pneg %p42
        %p200 = pneg %p39
        %p201 = pneg %p63
        %p202 = pneg %p60
        %p203 = pneg %p84
        %p204 = pneg %p81
        %p205 = pneg %p110
        %p206 = pneg %p107
        %s207 = sand.u32 %s97, 1
        %s208 = scalar_lea.sflag [#allocation4], %s207
        %s209 = sand.u32 %s97, 1
        %s210 = smul.addr %s209, 8
        %s211 = scalar_lea.vmem [#allocation8], %s210
        %v212 = vld [vmem:[#allocation5] sm:$0x7]
        %v213 = vld [vmem:[%s181] sm:$0xff]
        %v215 = vcombine.high %v213, %v213
        %217 = vxpose.xlu0.b32.start [1/16] %v213, 128
        %218 = vxpose.xlu0.b32.cont [2/16] 0.0, 128
        %219 = vxpose.xlu0.b32.cont [3/16] 0.0, 128
        %220 = vxpose.xlu0.b32.cont [4/16] 0.0, 128
        %221 = vxpose.xlu0.b32.cont [5/16] 0.0, 128
        %222 = vxpose.xlu0.b32.cont [6/16] 0.0, 128
        %223 = vxpose.xlu0.b32.cont [7/16] 0.0, 128
        %224 = vxpose.xlu0.b32.cont [8/16] 0.0, 128
        %225 = vxpose.xlu0.b32.cont [9/16] 0.0, 128
        %226 = vxpose.xlu0.b32.cont [10/16] 0.0, 128
        %227 = vxpose.xlu0.b32.cont [11/16] 0.0, 128
        %228 = vxpose.xlu0.b32.cont [12/16] 0.0, 128
        %229 = vxpose.xlu0.b32.cont [13/16] 0.0, 128
        %230 = vxpose.xlu0.b32.cont [14/16] 0.0, 128
        %231 = vxpose.xlu0.b32.cont [15/16] 0.0, 128
        %232 = vxpose.xlu0.b32.end [16/16] 0.0, 128
        %v233 = vpop.trf.xlu0
        %v234 = vpop.trf.xlu0
        %v235 = vpop.trf.xlu0
        %v236 = vpop.trf.xlu0
        %v237 = vpop.trf.xlu0
        %v238 = vpop.trf.xlu0
        %v239 = vpop.trf.xlu0
        %v240 = vpop.trf.xlu0
        %v241 = vpop.trf.xlu0
        %v242 = vpop.trf.xlu0
        %v243 = vpop.trf.xlu0
        %v244 = vpop.trf.xlu0
        %v245 = vpop.trf.xlu0
        %v246 = vpop.trf.xlu0
        %v247 = vpop.trf.xlu0
        %v248 = vpop.trf.xlu0
        %249 = vxpose.xlu0.b32.start [1/16] %v215, 128
        %250 = vxpose.xlu0.b32.cont [2/16] 0.0, 128
        %251 = vxpose.xlu0.b32.cont [3/16] 0.0, 128
        %252 = vxpose.xlu0.b32.cont [4/16] 0.0, 128
        %253 = vxpose.xlu0.b32.cont [5/16] 0.0, 128
        %254 = vxpose.xlu0.b32.cont [6/16] 0.0, 128
        %255 = vxpose.xlu0.b32.cont [7/16] 0.0, 128
        %256 = vxpose.xlu0.b32.cont [8/16] 0.0, 128
        %257 = vxpose.xlu0.b32.cont [9/16] 0.0, 128
        %258 = vxpose.xlu0.b32.cont [10/16] 0.0, 128
        %259 = vxpose.xlu0.b32.cont [11/16] 0.0, 128
        %260 = vxpose.xlu0.b32.cont [12/16] 0.0, 128
        %261 = vxpose.xlu0.b32.cont [13/16] 0.0, 128
        %262 = vxpose.xlu0.b32.cont [14/16] 0.0, 128
        %263 = vxpose.xlu0.b32.cont [15/16] 0.0, 128
        %264 = vxpose.xlu0.b32.end [16/16] 0.0, 128
        %v265 = vpop.trf.xlu0
        %v266 = vpop.trf.xlu0
        %v267 = vpop.trf.xlu0
        %v268 = vpop.trf.xlu0
        %v269 = vpop.trf.xlu0
        %v270 = vpop.trf.xlu0
        %v271 = vpop.trf.xlu0
        %v272 = vpop.trf.xlu0
        %v273 = vpop.trf.xlu0
        %v274 = vpop.trf.xlu0
        %v275 = vpop.trf.xlu0
        %v276 = vpop.trf.xlu0
        %v277 = vpop.trf.xlu0
        %v278 = vpop.trf.xlu0
        %v279 = vpop.trf.xlu0
        %v280 = vpop.trf.xlu0
        %vm281 = vcmask 31744
        %v283 = vsel %vm281, %v233, 0
        %v286 = vsel %vm281, %v234, 0
        %v289 = vsel %vm281, %v235, 0
        %v292 = vsel %vm281, %v236, 0
        %v295 = vsel %vm281, %v237, 0
        %v298 = vsel %vm281, %v238, 0
        %v301 = vsel %vm281, %v239, 0
        %v304 = vsel %vm281, %v240, 0
        %v307 = vsel %vm281, %v241, 0
        %v310 = vsel %vm281, %v242, 0
        %v313 = vsel %vm281, %v243, 0
        %v316 = vsel %vm281, %v244, 0
        %v319 = vsel %vm281, %v245, 0
        %v322 = vsel %vm281, %v246, 0
        %v325 = vsel %vm281, %v247, 0
        %v328 = vsel %vm281, %v248, 0
        %v331 = vsel %vm281, %v265, 0
        %v334 = vsel %vm281, %v266, 0
        %v337 = vsel %vm281, %v267, 0
        %v340 = vsel %vm281, %v268, 0
        %v343 = vsel %vm281, %v269, 0
        %v346 = vsel %vm281, %v270, 0
        %v349 = vsel %vm281, %v271, 0
        %v352 = vsel %vm281, %v272, 0
        %v355 = vsel %vm281, %v273, 0
        %v358 = vsel %vm281, %v274, 0
        %v361 = vsel %vm281, %v275, 0
        %v364 = vsel %vm281, %v276, 0
        %v367 = vsel %vm281, %v277, 0
        %v370 = vsel %vm281, %v278, 0
        %v373 = vsel %vm281, %v279, 0
        %v376 = vsel %vm281, %v280, 0
        %v379 = vsel %vm281, %v212, 0
        %381 = vmatprep.subr.mxu0 0.0
        %382 = vmatpush1.xpose.msra.mxu0 %v379
        %383 = vmatprep.subr.mxu0 0.0
        %384 = vmatpush1.xpose.msra.mxu0 0.0
        %385 = vmatprep.subr.mxu0 0.0
        %386 = vmatpush1.xpose.msra.mxu0 0.0
        %387 = vmatprep.subr.mxu0 0.0
        %388 = vmatpush1.xpose.msra.mxu0 0.0
        %389 = vmatprep.subr.mxu0 0.0
        %390 = vmatpush1.xpose.msra.mxu0 0.0
        %391 = vmatprep.subr.mxu0 0.0
        %392 = vmatpush1.xpose.msra.mxu0 0.0
        %393 = vmatprep.subr.mxu0 0.0
        %394 = vmatpush1.xpose.msra.mxu0 0.0
        %395 = vmatprep.subr.mxu0 0.0
        %396 = vmatpush1.xpose.msra.mxu0 0.0
        %397 = vmatprep.subr.mxu0 0.0
        %398 = vmatpush1.xpose.msra.mxu0 0.0
        %399 = vmatprep.subr.mxu0 0.0
        %400 = vmatpush1.xpose.msra.mxu0 0.0
        %401 = vmatprep.subr.mxu0 0.0
        %402 = vmatpush1.xpose.msra.mxu0 0.0
        %403 = vmatprep.subr.mxu0 0.0
        %404 = vmatpush1.xpose.msra.mxu0 0.0
        %405 = vmatprep.subr.mxu0 0.0
        %406 = vmatpush1.xpose.msra.mxu0 0.0
        %407 = vmatprep.subr.mxu0 0.0
        %408 = vmatpush1.xpose.msra.mxu0 0.0
        %409 = vmatprep.subr.mxu0 0.0
        %410 = vmatpush1.xpose.msra.mxu0 0.0
        %411 = vmatprep.subr.mxu0 0.0
        %412 = vmatpush1.xpose.msra.mxu0 0.0
        %413 = vmatprep.subr.mxu0 0.0
        %414 = vmatpush1.xpose.msra.mxu0 0.0
        %415 = vmatprep.subr.mxu0 0.0
        %416 = vmatpush1.xpose.msra.mxu0 0.0
        %417 = vmatprep.subr.mxu0 0.0
        %418 = vmatpush1.xpose.msra.mxu0 0.0
        %419 = vmatprep.subr.mxu0 0.0
        %420 = vmatpush1.xpose.msra.mxu0 0.0
        %421 = vmatprep.subr.mxu0 0.0
        %422 = vmatpush1.xpose.msra.mxu0 0.0
        %423 = vmatprep.subr.mxu0 0.0
        %424 = vmatpush1.xpose.msra.mxu0 0.0
        %425 = vmatprep.subr.mxu0 0.0
        %426 = vmatpush1.xpose.msra.mxu0 0.0
        %427 = vmatprep.subr.mxu0 0.0
        %428 = vmatpush1.xpose.msra.mxu0 0.0
        %429 = vmatprep.subr.mxu0 0.0
        %430 = vmatpush1.xpose.msra.mxu0 0.0
        %431 = vmatprep.subr.mxu0 0.0
        %432 = vmatpush1.xpose.msra.mxu0 0.0
        %433 = vmatprep.subr.mxu0 0.0
        %434 = vmatpush1.xpose.msra.mxu0 0.0
        %435 = vmatprep.subr.mxu0 0.0
        %436 = vmatpush1.xpose.msra.mxu0 0.0
        %437 = vmatprep.subr.mxu0 0.0
        %438 = vmatpush1.xpose.msra.mxu0 0.0
        %439 = vmatprep.subr.mxu0 0.0
        %440 = vmatpush1.xpose.msra.mxu0 0.0
        %441 = vmatprep.subr.mxu0 0.0
        %442 = vmatpush1.xpose.msra.mxu0 0.0
        %443 = vmatprep.subr.mxu0 0.0
        %444 = vmatpush1.xpose.msra.mxu0 0.0
        %445 = vmatprep.mubr.f32.mxu0 0.0
        %446 = vmatmul.mubr.f32.gmra.mrb[0].mxu0 %v283
        %v447 = vpop.f32.mrb[0].mxu0
        %v448 = vadd.f32 0.0, %v447
        %v449 = vpop.f32.mrb[0].mxu0
        %450 = vmatprep.mubr.f32.mxu0 0.0
        %451 = vmatmul.mubr.f32.gmra.mrb[0].mxu0 %v286
        %v452 = vpop.f32.mrb[0].mxu0
        %v453 = vadd.f32 0.0, %v452
        %v454 = vpop.f32.mrb[0].mxu0
        %455 = vmatprep.mubr.f32.mxu0 0.0
        %456 = vmatmul.mubr.f32.gmra.mrb[0].mxu0 %v289
        %v457 = vpop.f32.mrb[0].mxu0
        %v458 = vadd.f32 0.0, %v457
        %v459 = vpop.f32.mrb[0].mxu0
        %460 = vmatprep.mubr.f32.mxu0 0.0
        %461 = vmatmul.mubr.f32.gmra.mrb[0].mxu0 %v292
        %v462 = vpop.f32.mrb[0].mxu0
        %v463 = vadd.f32 0.0, %v462
        %v464 = vpop.f32.mrb[0].mxu0
        %465 = vmatprep.mubr.f32.mxu0 0.0
        %466 = vmatmul.mubr.f32.gmra.mrb[0].mxu0 %v295
        %v467 = vpop.f32.mrb[0].mxu0
        %v468 = vadd.f32 0.0, %v467
        %v469 = vpop.f32.mrb[0].mxu0
        %470 = vmatprep.mubr.f32.mxu0 0.0
        %471 = vmatmul.mubr.f32.gmra.mrb[0].mxu0 %v298
        %v472 = vpop.f32.mrb[0].mxu0
        %v473 = vadd.f32 0.0, %v472
        %v474 = vpop.f32.mrb[0].mxu0
        %475 = vmatprep.mubr.f32.mxu0 0.0
        %476 = vmatmul.mubr.f32.gmra.mrb[0].mxu0 %v301
        %v477 = vpop.f32.mrb[0].mxu0
        %v478 = vadd.f32 0.0, %v477
        %v479 = vpop.f32.mrb[0].mxu0
        %480 = vmatprep.mubr.f32.mxu0 0.0
        %481 = vmatmul.mubr.f32.gmra.mrb[0].mxu0 %v304
        %v482 = vpop.f32.mrb[0].mxu0
        %v483 = vadd.f32 0.0, %v482
        %v484 = vpop.f32.mrb[0].mxu0
        %485 = vmatprep.mubr.f32.mxu0 0.0
        %486 = vmatmul.mubr.f32.gmra.mrb[0].mxu0 %v307
        %v487 = vpop.f32.mrb[0].mxu0
        %v488 = vadd.f32 0.0, %v487
        %v489 = vpop.f32.mrb[0].mxu0
        %490 = vmatprep.mubr.f32.mxu0 0.0
        %491 = vmatmul.mubr.f32.gmra.mrb[0].mxu0 %v310
        %v492 = vpop.f32.mrb[0].mxu0
        %v493 = vadd.f32 0.0, %v492
        %v494 = vpop.f32.mrb[0].mxu0
        %495 = vmatprep.mubr.f32.mxu0 0.0
        %496 = vmatmul.mubr.f32.gmra.mrb[0].mxu0 %v313
        %v497 = vpop.f32.mrb[0].mxu0
        %v498 = vadd.f32 0.0, %v497
        %v499 = vpop.f32.mrb[0].mxu0
        %500 = vmatprep.mubr.f32.mxu0 0.0
        %501 = vmatmul.mubr.f32.gmra.mrb[0].mxu0 %v316
        %v502 = vpop.f32.mrb[0].mxu0
        %v503 = vadd.f32 0.0, %v502
        %v504 = vpop.f32.mrb[0].mxu0
        %505 = vmatprep.mubr.f32.mxu0 0.0
        %506 = vmatmul.mubr.f32.gmra.mrb[0].mxu0 %v319
        %v507 = vpop.f32.mrb[0].mxu0
        %v508 = vadd.f32 0.0, %v507
        %v509 = vpop.f32.mrb[0].mxu0
        %510 = vmatprep.mubr.f32.mxu0 0.0
        %511 = vmatmul.mubr.f32.gmra.mrb[0].mxu0 %v322
        %v512 = vpop.f32.mrb[0].mxu0
        %v513 = vadd.f32 0.0, %v512
        %v514 = vpop.f32.mrb[0].mxu0
        %515 = vmatprep.mubr.f32.mxu0 0.0
        %516 = vmatmul.mubr.f32.gmra.mrb[0].mxu0 %v325
        %v517 = vpop.f32.mrb[0].mxu0
        %v518 = vadd.f32 0.0, %v517
        %v519 = vpop.f32.mrb[0].mxu0
        %520 = vmatprep.mubr.f32.mxu0 0.0
        %521 = vmatmul.mubr.f32.gmra.mrb[0].mxu0 %v328
        %v522 = vpop.f32.mrb[0].mxu0
        %v523 = vadd.f32 0.0, %v522
        %v524 = vpop.f32.mrb[0].mxu0
        %525 = vmatprep.mubr.f32.mxu0 0.0
        %526 = vmatmul.mubr.f32.gmra.mrb[0].mxu0 %v331
        %v527 = vpop.f32.mrb[0].mxu0
        %v528 = vadd.f32 0.0, %v527
        %v529 = vpop.f32.mrb[0].mxu0
        %530 = vmatprep.mubr.f32.mxu0 0.0
        %531 = vmatmul.mubr.f32.gmra.mrb[0].mxu0 %v334
        %v532 = vpop.f32.mrb[0].mxu0
        %v533 = vadd.f32 0.0, %v532
        %v534 = vpop.f32.mrb[0].mxu0
        %535 = vmatprep.mubr.f32.mxu0 0.0
        %536 = vmatmul.mubr.f32.gmra.mrb[0].mxu0 %v337
        %v537 = vpop.f32.mrb[0].mxu0
        %v538 = vadd.f32 0.0, %v537
        %v539 = vpop.f32.mrb[0].mxu0
        %540 = vmatprep.mubr.f32.mxu0 0.0
        %541 = vmatmul.mubr.f32.gmra.mrb[0].mxu0 %v340
        %v542 = vpop.f32.mrb[0].mxu0
        %v543 = vadd.f32 0.0, %v542
        %v544 = vpop.f32.mrb[0].mxu0
        %545 = vmatprep.mubr.f32.mxu0 0.0
        %546 = vmatmul.mubr.f32.gmra.mrb[0].mxu0 %v343
        %v547 = vpop.f32.mrb[0].mxu0
        %v548 = vadd.f32 0.0, %v547
        %v549 = vpop.f32.mrb[0].mxu0
        %550 = vmatprep.mubr.f32.mxu0 0.0
        %551 = vmatmul.mubr.f32.gmra.mrb[0].mxu0 %v346
        %v552 = vpop.f32.mrb[0].mxu0
        %v553 = vadd.f32 0.0, %v552
        %v554 = vpop.f32.mrb[0].mxu0
        %555 = vmatprep.mubr.f32.mxu0 0.0
        %556 = vmatmul.mubr.f32.gmra.mrb[0].mxu0 %v349
        %v557 = vpop.f32.mrb[0].mxu0
        %v558 = vadd.f32 0.0, %v557
        %v559 = vpop.f32.mrb[0].mxu0
        %560 = vmatprep.mubr.f32.mxu0 0.0
        %561 = vmatmul.mubr.f32.gmra.mrb[0].mxu0 %v352
        %v562 = vpop.f32.mrb[0].mxu0
        %v563 = vadd.f32 0.0, %v562
        %v564 = vpop.f32.mrb[0].mxu0
        %565 = vmatprep.mubr.f32.mxu0 0.0
        %566 = vmatmul.mubr.f32.gmra.mrb[0].mxu0 %v355
        %v567 = vpop.f32.mrb[0].mxu0
        %v568 = vadd.f32 0.0, %v567
        %v569 = vpop.f32.mrb[0].mxu0
        %570 = vmatprep.mubr.f32.mxu0 0.0
        %571 = vmatmul.mubr.f32.gmra.mrb[0].mxu0 %v358
        %v572 = vpop.f32.mrb[0].mxu0
        %v573 = vadd.f32 0.0, %v572
        %v574 = vpop.f32.mrb[0].mxu0
        %575 = vmatprep.mubr.f32.mxu0 0.0
        %576 = vmatmul.mubr.f32.gmra.mrb[0].mxu0 %v361
        %v577 = vpop.f32.mrb[0].mxu0
        %v578 = vadd.f32 0.0, %v577
        %v579 = vpop.f32.mrb[0].mxu0
        %580 = vmatprep.mubr.f32.mxu0 0.0
        %581 = vmatmul.mubr.f32.gmra.mrb[0].mxu0 %v364
        %v582 = vpop.f32.mrb[0].mxu0
        %v583 = vadd.f32 0.0, %v582
        %v584 = vpop.f32.mrb[0].mxu0
        %585 = vmatprep.mubr.f32.mxu0 0.0
        %586 = vmatmul.mubr.f32.gmra.mrb[0].mxu0 %v367
        %v587 = vpop.f32.mrb[0].mxu0
        %v588 = vadd.f32 0.0, %v587
        %v589 = vpop.f32.mrb[0].mxu0
        %590 = vmatprep.mubr.f32.mxu0 0.0
        %591 = vmatmul.mubr.f32.gmra.mrb[0].mxu0 %v370
        %v592 = vpop.f32.mrb[0].mxu0
        %v593 = vadd.f32 0.0, %v592
        %v594 = vpop.f32.mrb[0].mxu0
        %595 = vmatprep.mubr.f32.mxu0 0.0
        %596 = vmatmul.mubr.f32.gmra.mrb[0].mxu0 %v373
        %v597 = vpop.f32.mrb[0].mxu0
        %v598 = vadd.f32 0.0, %v597
        %v599 = vpop.f32.mrb[0].mxu0
        %600 = vmatprep.mubr.f32.mxu0 0.0
        %601 = vmatmul.mubr.f32.gmra.mrb[0].mxu0 %v376
        %v602 = vpop.f32.mrb[0].mxu0
        %v603 = vadd.f32 0.0, %v602
        %v604 = vpop.f32.mrb[0].mxu0
        %605 = vdwg.mxu0
        %606 = vxpose.xlu0.b32.start [1/16] %v448, 128
        %607 = vxpose.xlu0.b32.cont [2/16] %v453, 128
        %608 = vxpose.xlu0.b32.cont [3/16] %v458, 128
        %609 = vxpose.xlu0.b32.cont [4/16] %v463, 128
        %610 = vxpose.xlu0.b32.cont [5/16] %v468, 128
        %611 = vxpose.xlu0.b32.cont [6/16] %v473, 128
        %612 = vxpose.xlu0.b32.cont [7/16] %v478, 128
        %613 = vxpose.xlu0.b32.cont [8/16] %v483, 128
        %614 = vxpose.xlu0.b32.cont [9/16] %v488, 128
        %615 = vxpose.xlu0.b32.cont [10/16] %v493, 128
        %616 = vxpose.xlu0.b32.cont [11/16] %v498, 128
        %617 = vxpose.xlu0.b32.cont [12/16] %v503, 128
        %618 = vxpose.xlu0.b32.cont [13/16] %v508, 128
        %619 = vxpose.xlu0.b32.cont [14/16] %v513, 128
        %620 = vxpose.xlu0.b32.cont [15/16] %v518, 128
        %621 = vxpose.xlu0.b32.end [16/16] %v523, 128
        %v622 = vpop.trf.xlu0
        %v623 = vpop.trf.xlu0
        %v624 = vpop.trf.xlu0
        %v625 = vpop.trf.xlu0
        %v626 = vpop.trf.xlu0
        %v627 = vpop.trf.xlu0
        %v628 = vpop.trf.xlu0
        %v629 = vpop.trf.xlu0
        %v630 = vpop.trf.xlu0
        %v631 = vpop.trf.xlu0
        %v632 = vpop.trf.xlu0
        %v633 = vpop.trf.xlu0
        %v634 = vpop.trf.xlu0
        %v635 = vpop.trf.xlu0
        %v636 = vpop.trf.xlu0
        %v637 = vpop.trf.xlu0
        %638 = vxpose.xlu0.b32.start [1/16] %v528, 128
        %639 = vxpose.xlu0.b32.cont [2/16] %v533, 128
        %640 = vxpose.xlu0.b32.cont [3/16] %v538, 128
        %641 = vxpose.xlu0.b32.cont [4/16] %v543, 128
        %642 = vxpose.xlu0.b32.cont [5/16] %v548, 128
        %643 = vxpose.xlu0.b32.cont [6/16] %v553, 128
        %644 = vxpose.xlu0.b32.cont [7/16] %v558, 128
        %645 = vxpose.xlu0.b32.cont [8/16] %v563, 128
        %646 = vxpose.xlu0.b32.cont [9/16] %v568, 128
        %647 = vxpose.xlu0.b32.cont [10/16] %v573, 128
        %648 = vxpose.xlu0.b32.cont [11/16] %v578, 128
        %649 = vxpose.xlu0.b32.cont [12/16] %v583, 128
        %650 = vxpose.xlu0.b32.cont [13/16] %v588, 128
        %651 = vxpose.xlu0.b32.cont [14/16] %v593, 128
        %652 = vxpose.xlu0.b32.cont [15/16] %v598, 128
        %653 = vxpose.xlu0.b32.end [16/16] %v603, 128
        %v654 = vpop.trf.xlu0
        %v655 = vpop.trf.xlu0
        %v656 = vpop.trf.xlu0
        %v657 = vpop.trf.xlu0
        %v658 = vpop.trf.xlu0
        %v659 = vpop.trf.xlu0
        %v660 = vpop.trf.xlu0
        %v661 = vpop.trf.xlu0
        %v662 = vpop.trf.xlu0
        %v663 = vpop.trf.xlu0
        %v664 = vpop.trf.xlu0
        %v665 = vpop.trf.xlu0
        %v666 = vpop.trf.xlu0
        %v667 = vpop.trf.xlu0
        %v668 = vpop.trf.xlu0
        %v669 = vpop.trf.xlu0
        %v670 = vld [vmem:[#allocation7] sm:$0x7]
        %672 = vset.pattern.permute.xlu0 0
        %673 = vperm.xlu0 %672, %v670
        %v674 = vpop.permute.xlu0 %673
        %v676 = vadd.f32 %v622, %v674
        %v677 = vadd.f32 %v654, %v674
        %v680 = vcombine.low %v676, %v677
        %682 = vst [vmem:[%s211] sm:$0x77] %v680
        %s683 = sand.u32 %s97, 1
        %s684 = scalar_lea.sflag [#allocation4], %s683
        %s685 = sand.u32 %s97, 1
        %s686 = smul.addr %s685, 8
        %s687 = scalar_lea.vmem [#allocation8], %s686
        // Predicated region
        $region45: #{tpu_custom_call.1} parent=31 // pred_check
          %p688 = pneg %p107
        $region46: #{tpu_custom_call.1} parent=31 // pred_check_branch
          %690 = sbr.rel (%p688) target = $region48
        $region47: #{tpu_custom_call.1} parent=31 // pred_region
          %s692 = ssub.s32 128, 128
          %693 = vsyncadd %s684, %s692
          %s694 = smul.addr %s21, 2
          %s695 = smul.addr %s694, 64
          %s696 = scalar_lea.hbm %s3, %s695
          %s698 = sshll.u32 %s687, 4
          %s699 = int_to_ptr.vmem [resolvable:$true] %s698
          %701 = dma.vmem_to_hbm [thread:$0]  %s699, 128, %s696, %s684
        $region48: #{tpu_custom_call.1} parent=31 // pred_fallthru
          _
      $region32: #{tpu_custom_call.1} parent=5 // pred_fallthru
        _
      %p702 = scmp.le.s32.totalorder 2, %s16
      // Predicated region
      $region49: #{tpu_custom_call.1} parent=5 // pred_check
        %p703 = pneg %p702
      $region50: #{tpu_custom_call.1} parent=5 // pred_check_branch
        %705 = sbr.rel (%p703) target = $region52
      $region51: #{tpu_custom_call.1} parent=5 // pred_region
        %s706 = ssub.s32 %s16, 2
        // Predicated region
        $region53: #{tpu_custom_call.1} parent=51 // pred_check
          %p707 = pneg %p113
        $region54: #{tpu_custom_call.1} parent=51 // pred_check_branch
          %709 = sbr.rel (%p707) target = $region56
        $region55: #{tpu_custom_call.1} parent=51 // pred_region
          %s710 = sand.u32 %s98, 1
          %s711 = scalar_lea.sflag [#allocation4], %s710
          %s712 = sand.u32 %s98, 1
          %s713 = smul.addr %s712, 8
          %s714 = scalar_lea.vmem [#allocation8], %s713
          %715 = dma.done %s711, 128
        $region56: #{tpu_custom_call.1} parent=51 // pred_fallthru
          _
      $region52: #{tpu_custom_call.1} parent=5 // pred_fallthru
        _
    $region6: #{tpu_custom_call.1} parent=1 // loop_footer
      %s20 = sadd.s32 1, %s16
    $region7: #{tpu_custom_call.1} parent=1 // loop_footer_branch
      %15 = sbr.rel target = $region3
    $region8: #{tpu_custom_call.1} parent=1 // loop_exit
      _
    %716 = vsyncpa [#allocation3], 1
    %s717 = scalar_lea.sflag [#allocation3], 1
    %718 = vsyncpa %s717, 1
    %719 = vsyncpa [#allocation6], 1
    %720 = vsyncpa [#allocation4], 1
    %s721 = scalar_lea.sflag [#allocation4], 1
    %722 = vsyncpa %s721, 1

// kernel: tpu_custom_call.1
$region0: #{tpu_custom_call.1}
  #allocation0 [shape = 'u32[]', space=smem, size = 0x4, offset = 0x4, fixed_abs, tag = 'smem constant byte address 0x4 - core index']
  #allocation1 [shape = 'u32[144,128]{1,0:T(1,128)}', space=vmem, size = 0x12000, scoped, tag = 'internal scratch']
  %s0 = inlined_call_operand.hbm [shape: f32[2,4,256], index: 0, kind: input, shape index: {}]
  %s1 = inlined_call_operand.hbm [shape: f32[3,4], index: 1, kind: input, shape index: {}]
  %s2 = inlined_call_operand.hbm [shape: f32[3,1], index: 2, kind: input, shape index: {}]
  %s3 = inlined_call_operand.hbm [shape: f32[2,3,256], index: 3, kind: output, shape index: {}]
  %s4 = sld [smem:[#allocation0]]
  $region57: #{tpu_custom_call.1} parent=0
    _
  %s6 = ssub.s32 1, %s4
  %s7 = scalar_select 0, %s6, %s4
  $region1: #{tpu_custom_call.1} parent=0
    #allocation2 [shape = 'u8[8192]{0}', space=vmem, size = 0x2000, scoped, tag = 'input window, operand 0']
    #allocation3 [shape = 's32[2]{0}', space=sflag, size = 0x8, scoped, tag = 'scoped memory for tpu_custom_call.1']
    #allocation4 [shape = 's32[2]{0}', space=sflag, size = 0x8, scoped, tag = 'scoped memory for tpu_custom_call.1']
    #allocation5 [shape = 'u8[2048]{0}', space=vmem, size = 0x800, scoped, tag = 'input window, operand 1, single buffered']
    #allocation6 [shape = 's32[1]{0}', space=sflag, size = 0x4, scoped, tag = 'scoped memory for tpu_custom_call.1']
    #allocation7 [shape = 'u8[2048]{0}', space=vmem, size = 0x800, scoped, tag = 'input window, operand 2, single buffered']
    #allocation8 [shape = 'u8[8192]{0}', space=vmem, size = 0x2000, scoped, tag = 'output window, operand 0']
    %8 = vsyncpa [#allocation3], 0
    %s9 = scalar_lea.sflag [#allocation3], 1
    %10 = vsyncpa %s9, 0
    %11 = vsyncpa [#allocation6], 0
    %12 = vsyncpa [#allocation4], 0
    %s13 = scalar_lea.sflag [#allocation4], 1
    %14 = vsyncpa %s13, 0
    loop: start=0, step=1, limit=4
    $region2: #{tpu_custom_call.1} parent=1 // loop_pre_header
      _
    $region3: #{tpu_custom_call.1} parent=1 // loop_header
      %s16 = sphi 0, %s20
      %p17 = scmp.ge.s32.totalorder %s16, 4
      %s26 = sphi 0, %s28
      %s29 = sphi 0, %s26
      %s30 = sphi 0, %s29
      %s46 = sphi 0, %s30
      %s50 = sphi 0, %s50
      %s52 = sphi 0, %s50
      %s53 = sphi 0, %s52
      %s67 = sphi 0, %s53
      %s71 = sphi 0, %s71
      %s73 = sphi 0, %s71
      %s74 = sphi 0, %s73
      %s88 = sphi 0, %s74
      %s94 = sphi 0, %s96
      %s97 = sphi 0, %s94
      %s98 = sphi 0, %s97
      %s114 = sphi 0, %s98
    $region4: #{tpu_custom_call.1} parent=1 // loop_header_branch
      %19 = sbr.rel (%p17) target = $region8
    $region5: #{tpu_custom_call.1} parent=1 // loop_body
      %s21 = ssub.s32 %s16, 1
      %s22 = ssub.s32 %s16, 2
      %s23 = sadd.s32 %s16, 1
      %s24 = ssub.s32 %s16, %s23
      %p25 = scmp.eq.s32.totalorder %s24, 0
      %s27 = sadd.s32 %s26, 1
      %s28 = scalar_select %p25, %s26, %s27
      %p31 = pneg %p25
      %p32 = scmp.eq.s32.totalorder %s16, 1
      %p33 = por %p31, %p32
      %p34 = scmp.ne.s32.totalorder %s26, %s29
      %p35 = scmp.eq.s32.totalorder %s16, 0
      %p36 = por %p34, %p35
      %p37 = scmp.ne.s32.totalorder %s26, %s29
      %p38 = scmp.eq.s32.totalorder %s21, 1
      %p39 = por %p37, %p38
      %p40 = scmp.ne.s32.totalorder %s29, %s30
      %p41 = scmp.eq.s32.totalorder %s21, 0
      %p42 = por %p40, %p41
      %p43 = scmp.ne.s32.totalorder %s29, %s30
      %p44 = scmp.eq.s32.totalorder %s22, 1
      %p45 = por %p43, %p44
      %p47 = scmp.ne.s32.totalorder %s30, %s46
      %p48 = scmp.eq.s32.totalorder %s22, 0
      %p49 = por %p47, %p48
      %s51 = sadd.s32 %s50, 1
      %p54 = scmp.eq.s32.totalorder %s16, 1
      %p55 = scmp.ne.s32.totalorder %s50, %s52
      %p56 = scmp.eq.s32.totalorder %s16, 0
      %p57 = por %p55, %p56
      %p58 = scmp.ne.s32.totalorder %s50, %s52
      %p59 = scmp.eq.s32.totalorder %s21, 1
      %p60 = por %p58, %p59
      %p61 = scmp.ne.s32.totalorder %s52, %s53
      %p62 = scmp.eq.s32.totalorder %s21, 0
      %p63 = por %p61, %p62
      %p64 = scmp.ne.s32.totalorder %s52, %s53
      %p65 = scmp.eq.s32.totalorder %s22, 1
      %p66 = por %p64, %p65
      %p68 = scmp.ne.s32.totalorder %s53, %s67
      %p69 = scmp.eq.s32.totalorder %s22, 0
      %p70 = por %p68, %p69
      %s72 = sadd.s32 %s71, 1
      %p75 = scmp.eq.s32.totalorder %s16, 1
      %p76 = scmp.ne.s32.totalorder %s71, %s73
      %p77 = scmp.eq.s32.totalorder %s16, 0
      %p78 = por %p76, %p77
      %p79 = scmp.ne.s32.totalorder %s71, %s73
      %p80 = scmp.eq.s32.totalorder %s21, 1
      %p81 = por %p79, %p80
      %p82 = scmp.ne.s32.totalorder %s73, %s74
      %p83 = scmp.eq.s32.totalorder %s21, 0
      %p84 = por %p82, %p83
      %p85 = scmp.ne.s32.totalorder %s73, %s74
      %p86 = scmp.eq.s32.totalorder %s22, 1
      %p87 = por %p85, %p86
      %p89 = scmp.ne.s32.totalorder %s74, %s88
      %p90 = scmp.eq.s32.totalorder %s22, 0
      %p91 = por %p89, %p90
      %s92 = ssub.s32 %s16, %s23
      %p93 = scmp.eq.s32.totalorder %s92, 0
      %s95 = sadd.s32 %s94, 1
      %s96 = scalar_select %p93, %s94, %s95
      %p99 = pneg %p93
      %p100 = scmp.eq.s32.totalorder %s16, 1
      %p101 = por %p99, %p100
      %p102 = scmp.ne.s32.totalorder %s94, %s97
      %p103 = scmp.eq.s32.totalorder %s16, 0
      %p104 = por %p102, %p103
      %p105 = scmp.ne.s32.totalorder %s94, %s97
      %p106 = scmp.eq.s32.totalorder %s21, 1
      %p107 = por %p105, %p106
      %p108 = scmp.ne.s32.totalorder %s97, %s98
      %p109 = scmp.eq.s32.totalorder %s21, 0
      %p110 = por %p108, %p109
      %p111 = scmp.ne.s32.totalorder %s97, %s98
      %p112 = scmp.eq.s32.totalorder %s22, 1
      %p113 = por %p111, %p112
      %p115 = scmp.ne.s32.totalorder %s98, %s114
      %p116 = scmp.eq.s32.totalorder %s22, 0
      %p117 = por %p115, %p116
      %p118 = scmp.le.s32.totalorder 1, %s16
      %p119 = scmp.lt.s32.totalorder %s16, 3
      %p120 = pnand %p118, %p119
      %p121 = pneg %p120
      // Predicated region
      $region9: #{tpu_custom_call.1} parent=5 // pred_check
        _
      $region10: #{tpu_custom_call.1} parent=5 // pred_check_branch
        %123 = sbr.rel (%p120) target = $region12
      $region11: #{tpu_custom_call.1} parent=5 // pred_region
        %s124 = ssub.s32 %s16, 1
        // Predicated region
        $region13: #{tpu_custom_call.1} parent=11 // pred_check
          %p125 = pneg %p63
        $region14: #{tpu_custom_call.1} parent=11 // pred_check_branch
          %127 = sbr.rel (%p125) target = $region16
        $region15: #{tpu_custom_call.1} parent=11 // pred_region
          %s129 = ssub.s32 64, 64
          %130 = vsyncadd [#allocation6], %s129
          %s132 = sshll.u32 [#allocation5], 4
          %s133 = int_to_ptr.vmem [resolvable:$true] %s132
          %135 = dma.hbm_to_vmem [thread:$0]  %s1, 64, %s133, [#allocation6]
        $region16: #{tpu_custom_call.1} parent=11 // pred_fallthru
          _
        // Predicated region
        $region17: #{tpu_custom_call.1} parent=11 // pred_check
          %p136 = pneg %p84
        $region18: #{tpu_custom_call.1} parent=11 // pred_check_branch
          %138 = sbr.rel (%p136) target = $region20
        $region19: #{tpu_custom_call.1} parent=11 // pred_region
          %s140 = ssub.s32 64, 64
          %141 = vsyncadd [#allocation6], %s140
          %s143 = sshll.u32 [#allocation7], 4
          %s144 = int_to_ptr.vmem [resolvable:$true] %s143
          %146 = dma.hbm_to_vmem [thread:$0]  %s2, 64, %s144, [#allocation6]
        $region20: #{tpu_custom_call.1} parent=11 // pred_fallthru
          _
      $region12: #{tpu_custom_call.1} parent=5 // pred_fallthru
        _
      %p147 = scmp.lt.s32.totalorder %s16, 2
      // Predicated region
      $region21: #{tpu_custom_call.1} parent=5 // pred_check
        %p148 = pneg %p147
      $region22: #{tpu_custom_call.1} parent=5 // pred_check_branch
        %150 = sbr.rel (%p148) target = $region24
      $region23: #{tpu_custom_call.1} parent=5 // pred_region
        // Predicated region
        $region25: #{tpu_custom_call.1} parent=23 // pred_check
          %p151 = pneg %p36
        $region26: #{tpu_custom_call.1} parent=23 // pred_check_branch
          %153 = sbr.rel (%p151) target = $region28
        $region27: #{tpu_custom_call.1} parent=23 // pred_region
          %s154 = sand.u32 %s26, 1
          %s155 = scalar_lea.sflag [#allocation3], %s154
          %s156 = sand.u32 %s26, 1
          %s157 = smul.addr %s156, 8
          %s158 = scalar_lea.vmem [#allocation2], %s157
          %s160 = ssub.s32 128, 128
          %161 = vsyncadd %s155, %s160
          %s162 = smul.addr %s16, 2
          %s163 = smul.addr %s162, 64
          %s164 = scalar_lea.hbm %s0, %s163
          %s166 = sshll.u32 %s158, 4
          %s167 = int_to_ptr.vmem [resolvable:$true] %s166
          %169 = dma.hbm_to_vmem [thread:$0]  %s164, 128, %s167, %s155
        $region28: #{tpu_custom_call.1} parent=23 // pred_fallthru
          _
      $region24: #{tpu_custom_call.1} parent=5 // pred_fallthru
        _
      %p170 = scmp.le.s32.totalorder 1, %s16
      %p171 = scmp.lt.s32.totalorder %s16, 3
      %p172 = pnand %p170, %p171
      %p173 = pneg %p172
      // Predicated region
      $region29: #{tpu_custom_call.1} parent=5 // pred_check
        _
      $region30: #{tpu_custom_call.1} parent=5 // pred_check_branch
        %175 = sbr.rel (%p172) target = $region32
      $region31: #{tpu_custom_call.1} parent=5 // pred_region
        %s176 = ssub.s32 %s16, 1
        %s177 = sand.u32 %s29, 1
        %s178 = scalar_lea.sflag [#allocation3], %s177
        %s179 = sand.u32 %s29, 1
        %s180 = smul.addr %s179, 8
        %s181 = scalar_lea.vmem [#allocation2], %s180
        // Predicated region
        $region33: #{tpu_custom_call.1} parent=31 // pred_check
          %p182 = pneg %p42
        $region34: #{tpu_custom_call.1} parent=31 // pred_check_branch
          %184 = sbr.rel (%p182) target = $region36
        $region35: #{tpu_custom_call.1} parent=31 // pred_region
          %185 = dma.done %s178, 128
        $region36: #{tpu_custom_call.1} parent=31 // pred_fallthru
          _
        // Predicated region
        $region37: #{tpu_custom_call.1} parent=31 // pred_check
          %p186 = pneg %p63
        $region38: #{tpu_custom_call.1} parent=31 // pred_check_branch
          %188 = sbr.rel (%p186) target = $region40
        $region39: #{tpu_custom_call.1} parent=31 // pred_region
          %189 = dma.done [#allocation6], 64
        $region40: #{tpu_custom_call.1} parent=31 // pred_fallthru
          _
        // Predicated region
        $region41: #{tpu_custom_call.1} parent=31 // pred_check
          %p190 = pneg %p84
        $region42: #{tpu_custom_call.1} parent=31 // pred_check_branch
          %192 = sbr.rel (%p190) target = $region44
        $region43: #{tpu_custom_call.1} parent=31 // pred_region
          %193 = dma.done [#allocation6], 64
        $region44: #{tpu_custom_call.1} parent=31 // pred_fallthru
          _
        %s194 = sand.u32 %s29, 1
        %s195 = scalar_lea.sflag [#allocation3], %s194
        %s196 = sand.u32 %s29, 1
        %s197 = smul.addr %s196, 8
        %s198 = scalar_lea.vmem [#allocation2], %s197
        %p199 = pneg %p42
        %p200 = pneg %p39
        %p201 = pneg %p63
        %p202 = pneg %p60
        %p203 = pneg %p84
        %p204 = pneg %p81
        %p205 = pneg %p110
        %p206 = pneg %p107
        %s207 = sand.u32 %s97, 1
        %s208 = scalar_lea.sflag [#allocation4], %s207
        %s209 = sand.u32 %s97, 1
        %s210 = smul.addr %s209, 8
        %s211 = scalar_lea.vmem [#allocation8], %s210
        %v212 = vld [vmem:[#allocation5] sm:$0x7]
        %v213 = vld [vmem:[%s181] sm:$0xff]
        %v215 = vcombine.high %v213, %v213
        %217 = vxpose.xlu0.b32.start [1/16] %v213, 128
        %218 = vxpose.xlu0.b32.cont [2/16] 0.0, 128
        %219 = vxpose.xlu0.b32.cont [3/16] 0.0, 128
        %220 = vxpose.xlu0.b32.cont [4/16] 0.0, 128
        %221 = vxpose.xlu0.b32.cont [5/16] 0.0, 128
        %222 = vxpose.xlu0.b32.cont [6/16] 0.0, 128
        %223 = vxpose.xlu0.b32.cont [7/16] 0.0, 128
        %224 = vxpose.xlu0.b32.cont [8/16] 0.0, 128
        %225 = vxpose.xlu0.b32.cont [9/16] 0.0, 128
        %226 = vxpose.xlu0.b32.cont [10/16] 0.0, 128
        %227 = vxpose.xlu0.b32.cont [11/16] 0.0, 128
        %228 = vxpose.xlu0.b32.cont [12/16] 0.0, 128
        %229 = vxpose.xlu0.b32.cont [13/16] 0.0, 128
        %230 = vxpose.xlu0.b32.cont [14/16] 0.0, 128
        %231 = vxpose.xlu0.b32.cont [15/16] 0.0, 128
        %232 = vxpose.xlu0.b32.end [16/16] 0.0, 128
        %v233 = vpop.trf.xlu0
        %v234 = vpop.trf.xlu0
        %v235 = vpop.trf.xlu0
        %v236 = vpop.trf.xlu0
        %v237 = vpop.trf.xlu0
        %v238 = vpop.trf.xlu0
        %v239 = vpop.trf.xlu0
        %v240 = vpop.trf.xlu0
        %v241 = vpop.trf.xlu0
        %v242 = vpop.trf.xlu0
        %v243 = vpop.trf.xlu0
        %v244 = vpop.trf.xlu0
        %v245 = vpop.trf.xlu0
        %v246 = vpop.trf.xlu0
        %v247 = vpop.trf.xlu0
        %v248 = vpop.trf.xlu0
        %249 = vxpose.xlu0.b32.start [1/16] %v215, 128
        %250 = vxpose.xlu0.b32.cont [2/16] 0.0, 128
        %251 = vxpose.xlu0.b32.cont [3/16] 0.0, 128
        %252 = vxpose.xlu0.b32.cont [4/16] 0.0, 128
        %253 = vxpose.xlu0.b32.cont [5/16] 0.0, 128
        %254 = vxpose.xlu0.b32.cont [6/16] 0.0, 128
        %255 = vxpose.xlu0.b32.cont [7/16] 0.0, 128
        %256 = vxpose.xlu0.b32.cont [8/16] 0.0, 128
        %257 = vxpose.xlu0.b32.cont [9/16] 0.0, 128
        %258 = vxpose.xlu0.b32.cont [10/16] 0.0, 128
        %259 = vxpose.xlu0.b32.cont [11/16] 0.0, 128
        %260 = vxpose.xlu0.b32.cont [12/16] 0.0, 128
        %261 = vxpose.xlu0.b32.cont [13/16] 0.0, 128
        %262 = vxpose.xlu0.b32.cont [14/16] 0.0, 128
        %263 = vxpose.xlu0.b32.cont [15/16] 0.0, 128
        %264 = vxpose.xlu0.b32.end [16/16] 0.0, 128
        %v265 = vpop.trf.xlu0
        %v266 = vpop.trf.xlu0
        %v267 = vpop.trf.xlu0
        %v268 = vpop.trf.xlu0
        %v269 = vpop.trf.xlu0
        %v270 = vpop.trf.xlu0
        %v271 = vpop.trf.xlu0
        %v272 = vpop.trf.xlu0
        %v273 = vpop.trf.xlu0
        %v274 = vpop.trf.xlu0
        %v275 = vpop.trf.xlu0
        %v276 = vpop.trf.xlu0
        %v277 = vpop.trf.xlu0
        %v278 = vpop.trf.xlu0
        %v279 = vpop.trf.xlu0
        %v280 = vpop.trf.xlu0
        %vm281 = vcmask 31744
        %v283 = vsel %vm281, %v233, 0
        %v286 = vsel %vm281, %v234, 0
        %v289 = vsel %vm281, %v235, 0
        %v292 = vsel %vm281, %v236, 0
        %v295 = vsel %vm281, %v237, 0
        %v298 = vsel %vm281, %v238, 0
        %v301 = vsel %vm281, %v239, 0
        %v304 = vsel %vm281, %v240, 0
        %v307 = vsel %vm281, %v241, 0
        %v310 = vsel %vm281, %v242, 0
        %v313 = vsel %vm281, %v243, 0
        %v316 = vsel %vm281, %v244, 0
        %v319 = vsel %vm281, %v245, 0
        %v322 = vsel %vm281, %v246, 0
        %v325 = vsel %vm281, %v247, 0
        %v328 = vsel %vm281, %v248, 0
        %v331 = vsel %vm281, %v265, 0
        %v334 = vsel %vm281, %v266, 0
        %v337 = vsel %vm281, %v267, 0
        %v340 = vsel %vm281, %v268, 0
        %v343 = vsel %vm281, %v269, 0
        %v346 = vsel %vm281, %v270, 0
        %v349 = vsel %vm281, %v271, 0
        %v352 = vsel %vm281, %v272, 0
        %v355 = vsel %vm281, %v273, 0
        %v358 = vsel %vm281, %v274, 0
        %v361 = vsel %vm281, %v275, 0
        %v364 = vsel %vm281, %v276, 0
        %v367 = vsel %vm281, %v277, 0
        %v370 = vsel %vm281, %v278, 0
        %v373 = vsel %vm281, %v279, 0
        %v376 = vsel %vm281, %v280, 0
        %v379 = vsel %vm281, %v212, 0
        %381 = vmatprep.subr.mxu0 0.0
        %382 = vmatpush1.xpose.msra.mxu0 %v379
        %383 = vmatprep.subr.mxu0 0.0
        %384 = vmatpush1.xpose.msra.mxu0 0.0
        %385 = vmatprep.subr.mxu0 0.0
        %386 = vmatpush1.xpose.msra.mxu0 0.0
        %387 = vmatprep.subr.mxu0 0.0
        %388 = vmatpush1.xpose.msra.mxu0 0.0
        %389 = vmatprep.subr.mxu0 0.0
        %390 = vmatpush1.xpose.msra.mxu0 0.0
        %391 = vmatprep.subr.mxu0 0.0
        %392 = vmatpush1.xpose.msra.mxu0 0.0
        %393 = vmatprep.subr.mxu0 0.0
        %394 = vmatpush1.xpose.msra.mxu0 0.0
        %395 = vmatprep.subr.mxu0 0.0
        %396 = vmatpush1.xpose.msra.mxu0 0.0
        %397 = vmatprep.subr.mxu0 0.0
        %398 = vmatpush1.xpose.msra.mxu0 0.0
        %399 = vmatprep.subr.mxu0 0.0
        %400 = vmatpush1.xpose.msra.mxu0 0.0
        %401 = vmatprep.subr.mxu0 0.0
        %402 = vmatpush1.xpose.msra.mxu0 0.0
        %403 = vmatprep.subr.mxu0 0.0
        %404 = vmatpush1.xpose.msra.mxu0 0.0
        %405 = vmatprep.subr.mxu0 0.0
        %406 = vmatpush1.xpose.msra.mxu0 0.0
        %407 = vmatprep.subr.mxu0 0.0
        %408 = vmatpush1.xpose.msra.mxu0 0.0
        %409 = vmatprep.subr.mxu0 0.0
        %410 = vmatpush1.xpose.msra.mxu0 0.0
        %411 = vmatprep.subr.mxu0 0.0
        %412 = vmatpush1.xpose.msra.mxu0 0.0
        %413 = vmatprep.subr.mxu0 0.0
        %414 = vmatpush1.xpose.msra.mxu0 0.0
        %415 = vmatprep.subr.mxu0 0.0
        %416 = vmatpush1.xpose.msra.mxu0 0.0
        %417 = vmatprep.subr.mxu0 0.0
        %418 = vmatpush1.xpose.msra.mxu0 0.0
        %419 = vmatprep.subr.mxu0 0.0
        %420 = vmatpush1.xpose.msra.mxu0 0.0
        %421 = vmatprep.subr.mxu0 0.0
        %422 = vmatpush1.xpose.msra.mxu0 0.0
        %423 = vmatprep.subr.mxu0 0.0
        %424 = vmatpush1.xpose.msra.mxu0 0.0
        %425 = vmatprep.subr.mxu0 0.0
        %426 = vmatpush1.xpose.msra.mxu0 0.0
        %427 = vmatprep.subr.mxu0 0.0
        %428 = vmatpush1.xpose.msra.mxu0 0.0
        %429 = vmatprep.subr.mxu0 0.0
        %430 = vmatpush1.xpose.msra.mxu0 0.0
        %431 = vmatprep.subr.mxu0 0.0
        %432 = vmatpush1.xpose.msra.mxu0 0.0
        %433 = vmatprep.subr.mxu0 0.0
        %434 = vmatpush1.xpose.msra.mxu0 0.0
        %435 = vmatprep.subr.mxu0 0.0
        %436 = vmatpush1.xpose.msra.mxu0 0.0
        %437 = vmatprep.subr.mxu0 0.0
        %438 = vmatpush1.xpose.msra.mxu0 0.0
        %439 = vmatprep.subr.mxu0 0.0
        %440 = vmatpush1.xpose.msra.mxu0 0.0
        %441 = vmatprep.subr.mxu0 0.0
        %442 = vmatpush1.xpose.msra.mxu0 0.0
        %443 = vmatprep.subr.mxu0 0.0
        %444 = vmatpush1.xpose.msra.mxu0 0.0
        %445 = vmatprep.mubr.f32.mxu0 0.0
        %446 = vmatmul.mubr.f32.gmra.mrb[0].mxu0 %v283
        %v447 = vpop.f32.mrb[0].mxu0
        %v448 = vadd.f32 0.0, %v447
        %v449 = vpop.f32.mrb[0].mxu0
        %450 = vmatprep.mubr.f32.mxu0 0.0
        %451 = vmatmul.mubr.f32.gmra.mrb[0].mxu0 %v286
        %v452 = vpop.f32.mrb[0].mxu0
        %v453 = vadd.f32 0.0, %v452
        %v454 = vpop.f32.mrb[0].mxu0
        %455 = vmatprep.mubr.f32.mxu0 0.0
        %456 = vmatmul.mubr.f32.gmra.mrb[0].mxu0 %v289
        %v457 = vpop.f32.mrb[0].mxu0
        %v458 = vadd.f32 0.0, %v457
        %v459 = vpop.f32.mrb[0].mxu0
        %460 = vmatprep.mubr.f32.mxu0 0.0
        %461 = vmatmul.mubr.f32.gmra.mrb[0].mxu0 %v292
        %v462 = vpop.f32.mrb[0].mxu0
        %v463 = vadd.f32 0.0, %v462
        %v464 = vpop.f32.mrb[0].mxu0
        %465 = vmatprep.mubr.f32.mxu0 0.0
        %466 = vmatmul.mubr.f32.gmra.mrb[0].mxu0 %v295
        %v467 = vpop.f32.mrb[0].mxu0
        %v468 = vadd.f32 0.0, %v467
        %v469 = vpop.f32.mrb[0].mxu0
        %470 = vmatprep.mubr.f32.mxu0 0.0
        %471 = vmatmul.mubr.f32.gmra.mrb[0].mxu0 %v298
        %v472 = vpop.f32.mrb[0].mxu0
        %v473 = vadd.f32 0.0, %v472
        %v474 = vpop.f32.mrb[0].mxu0
        %475 = vmatprep.mubr.f32.mxu0 0.0
        %476 = vmatmul.mubr.f32.gmra.mrb[0].mxu0 %v301
        %v477 = vpop.f32.mrb[0].mxu0
        %v478 = vadd.f32 0.0, %v477
        %v479 = vpop.f32.mrb[0].mxu0
        %480 = vmatprep.mubr.f32.mxu0 0.0
        %481 = vmatmul.mubr.f32.gmra.mrb[0].mxu0 %v304
        %v482 = vpop.f32.mrb[0].mxu0
        %v483 = vadd.f32 0.0, %v482
        %v484 = vpop.f32.mrb[0].mxu0
        %485 = vmatprep.mubr.f32.mxu0 0.0
        %486 = vmatmul.mubr.f32.gmra.mrb[0].mxu0 %v307
        %v487 = vpop.f32.mrb[0].mxu0
        %v488 = vadd.f32 0.0, %v487
        %v489 = vpop.f32.mrb[0].mxu0
        %490 = vmatprep.mubr.f32.mxu0 0.0
        %491 = vmatmul.mubr.f32.gmra.mrb[0].mxu0 %v310
        %v492 = vpop.f32.mrb[0].mxu0
        %v493 = vadd.f32 0.0, %v492
        %v494 = vpop.f32.mrb[0].mxu0
        %495 = vmatprep.mubr.f32.mxu0 0.0
        %496 = vmatmul.mubr.f32.gmra.mrb[0].mxu0 %v313
        %v497 = vpop.f32.mrb[0].mxu0
        %v498 = vadd.f32 0.0, %v497
        %v499 = vpop.f32.mrb[0].mxu0
        %500 = vmatprep.mubr.f32.mxu0 0.0
        %501 = vmatmul.mubr.f32.gmra.mrb[0].mxu0 %v316
        %v502 = vpop.f32.mrb[0].mxu0
        %v503 = vadd.f32 0.0, %v502
        %v504 = vpop.f32.mrb[0].mxu0
        %505 = vmatprep.mubr.f32.mxu0 0.0
        %506 = vmatmul.mubr.f32.gmra.mrb[0].mxu0 %v319
        %v507 = vpop.f32.mrb[0].mxu0
        %v508 = vadd.f32 0.0, %v507
        %v509 = vpop.f32.mrb[0].mxu0
        %510 = vmatprep.mubr.f32.mxu0 0.0
        %511 = vmatmul.mubr.f32.gmra.mrb[0].mxu0 %v322
        %v512 = vpop.f32.mrb[0].mxu0
        %v513 = vadd.f32 0.0, %v512
        %v514 = vpop.f32.mrb[0].mxu0
        %515 = vmatprep.mubr.f32.mxu0 0.0
        %516 = vmatmul.mubr.f32.gmra.mrb[0].mxu0 %v325
        %v517 = vpop.f32.mrb[0].mxu0
        %v518 = vadd.f32 0.0, %v517
        %v519 = vpop.f32.mrb[0].mxu0
        %520 = vmatprep.mubr.f32.mxu0 0.0
        %521 = vmatmul.mubr.f32.gmra.mrb[0].mxu0 %v328
        %v522 = vpop.f32.mrb[0].mxu0
        %v523 = vadd.f32 0.0, %v522
        %v524 = vpop.f32.mrb[0].mxu0
        %525 = vmatprep.mubr.f32.mxu0 0.0
        %526 = vmatmul.mubr.f32.gmra.mrb[0].mxu0 %v331
        %v527 = vpop.f32.mrb[0].mxu0
        %v528 = vadd.f32 0.0, %v527
        %v529 = vpop.f32.mrb[0].mxu0
        %530 = vmatprep.mubr.f32.mxu0 0.0
        %531 = vmatmul.mubr.f32.gmra.mrb[0].mxu0 %v334
        %v532 = vpop.f32.mrb[0].mxu0
        %v533 = vadd.f32 0.0, %v532
        %v534 = vpop.f32.mrb[0].mxu0
        %535 = vmatprep.mubr.f32.mxu0 0.0
        %536 = vmatmul.mubr.f32.gmra.mrb[0].mxu0 %v337
        %v537 = vpop.f32.mrb[0].mxu0
        %v538 = vadd.f32 0.0, %v537
        %v539 = vpop.f32.mrb[0].mxu0
        %540 = vmatprep.mubr.f32.mxu0 0.0
        %541 = vmatmul.mubr.f32.gmra.mrb[0].mxu0 %v340
        %v542 = vpop.f32.mrb[0].mxu0
        %v543 = vadd.f32 0.0, %v542
        %v544 = vpop.f32.mrb[0].mxu0
        %545 = vmatprep.mubr.f32.mxu0 0.0
        %546 = vmatmul.mubr.f32.gmra.mrb[0].mxu0 %v343
        %v547 = vpop.f32.mrb[0].mxu0
        %v548 = vadd.f32 0.0, %v547
        %v549 = vpop.f32.mrb[0].mxu0
        %550 = vmatprep.mubr.f32.mxu0 0.0
        %551 = vmatmul.mubr.f32.gmra.mrb[0].mxu0 %v346
        %v552 = vpop.f32.mrb[0].mxu0
        %v553 = vadd.f32 0.0, %v552
        %v554 = vpop.f32.mrb[0].mxu0
        %555 = vmatprep.mubr.f32.mxu0 0.0
        %556 = vmatmul.mubr.f32.gmra.mrb[0].mxu0 %v349
        %v557 = vpop.f32.mrb[0].mxu0
        %v558 = vadd.f32 0.0, %v557
        %v559 = vpop.f32.mrb[0].mxu0
        %560 = vmatprep.mubr.f32.mxu0 0.0
        %561 = vmatmul.mubr.f32.gmra.mrb[0].mxu0 %v352
        %v562 = vpop.f32.mrb[0].mxu0
        %v563 = vadd.f32 0.0, %v562
        %v564 = vpop.f32.mrb[0].mxu0
        %565 = vmatprep.mubr.f32.mxu0 0.0
        %566 = vmatmul.mubr.f32.gmra.mrb[0].mxu0 %v355
        %v567 = vpop.f32.mrb[0].mxu0
        %v568 = vadd.f32 0.0, %v567
        %v569 = vpop.f32.mrb[0].mxu0
        %570 = vmatprep.mubr.f32.mxu0 0.0
        %571 = vmatmul.mubr.f32.gmra.mrb[0].mxu0 %v358
        %v572 = vpop.f32.mrb[0].mxu0
        %v573 = vadd.f32 0.0, %v572
        %v574 = vpop.f32.mrb[0].mxu0
        %575 = vmatprep.mubr.f32.mxu0 0.0
        %576 = vmatmul.mubr.f32.gmra.mrb[0].mxu0 %v361
        %v577 = vpop.f32.mrb[0].mxu0
        %v578 = vadd.f32 0.0, %v577
        %v579 = vpop.f32.mrb[0].mxu0
        %580 = vmatprep.mubr.f32.mxu0 0.0
        %581 = vmatmul.mubr.f32.gmra.mrb[0].mxu0 %v364
        %v582 = vpop.f32.mrb[0].mxu0
        %v583 = vadd.f32 0.0, %v582
        %v584 = vpop.f32.mrb[0].mxu0
        %585 = vmatprep.mubr.f32.mxu0 0.0
        %586 = vmatmul.mubr.f32.gmra.mrb[0].mxu0 %v367
        %v587 = vpop.f32.mrb[0].mxu0
        %v588 = vadd.f32 0.0, %v587
        %v589 = vpop.f32.mrb[0].mxu0
        %590 = vmatprep.mubr.f32.mxu0 0.0
        %591 = vmatmul.mubr.f32.gmra.mrb[0].mxu0 %v370
        %v592 = vpop.f32.mrb[0].mxu0
        %v593 = vadd.f32 0.0, %v592
        %v594 = vpop.f32.mrb[0].mxu0
        %595 = vmatprep.mubr.f32.mxu0 0.0
        %596 = vmatmul.mubr.f32.gmra.mrb[0].mxu0 %v373
        %v597 = vpop.f32.mrb[0].mxu0
        %v598 = vadd.f32 0.0, %v597
        %v599 = vpop.f32.mrb[0].mxu0
        %600 = vmatprep.mubr.f32.mxu0 0.0
        %601 = vmatmul.mubr.f32.gmra.mrb[0].mxu0 %v376
        %v602 = vpop.f32.mrb[0].mxu0
        %v603 = vadd.f32 0.0, %v602
        %v604 = vpop.f32.mrb[0].mxu0
        %605 = vdwg.mxu0
        %606 = vxpose.xlu0.b32.start [1/16] %v448, 128
        %607 = vxpose.xlu0.b32.cont [2/16] %v453, 128
        %608 = vxpose.xlu0.b32.cont [3/16] %v458, 128
        %609 = vxpose.xlu0.b32.cont [4/16] %v463, 128
        %610 = vxpose.xlu0.b32.cont [5/16] %v468, 128
        %611 = vxpose.xlu0.b32.cont [6/16] %v473, 128
        %612 = vxpose.xlu0.b32.cont [7/16] %v478, 128
        %613 = vxpose.xlu0.b32.cont [8/16] %v483, 128
        %614 = vxpose.xlu0.b32.cont [9/16] %v488, 128
        %615 = vxpose.xlu0.b32.cont [10/16] %v493, 128
        %616 = vxpose.xlu0.b32.cont [11/16] %v498, 128
        %617 = vxpose.xlu0.b32.cont [12/16] %v503, 128
        %618 = vxpose.xlu0.b32.cont [13/16] %v508, 128
        %619 = vxpose.xlu0.b32.cont [14/16] %v513, 128
        %620 = vxpose.xlu0.b32.cont [15/16] %v518, 128
        %621 = vxpose.xlu0.b32.end [16/16] %v523, 128
        %v622 = vpop.trf.xlu0
        %v623 = vpop.trf.xlu0
        %v624 = vpop.trf.xlu0
        %v625 = vpop.trf.xlu0
        %v626 = vpop.trf.xlu0
        %v627 = vpop.trf.xlu0
        %v628 = vpop.trf.xlu0
        %v629 = vpop.trf.xlu0
        %v630 = vpop.trf.xlu0
        %v631 = vpop.trf.xlu0
        %v632 = vpop.trf.xlu0
        %v633 = vpop.trf.xlu0
        %v634 = vpop.trf.xlu0
        %v635 = vpop.trf.xlu0
        %v636 = vpop.trf.xlu0
        %v637 = vpop.trf.xlu0
        %638 = vxpose.xlu0.b32.start [1/16] %v528, 128
        %639 = vxpose.xlu0.b32.cont [2/16] %v533, 128
        %640 = vxpose.xlu0.b32.cont [3/16] %v538, 128
        %641 = vxpose.xlu0.b32.cont [4/16] %v543, 128
        %642 = vxpose.xlu0.b32.cont [5/16] %v548, 128
        %643 = vxpose.xlu0.b32.cont [6/16] %v553, 128
        %644 = vxpose.xlu0.b32.cont [7/16] %v558, 128
        %645 = vxpose.xlu0.b32.cont [8/16] %v563, 128
        %646 = vxpose.xlu0.b32.cont [9/16] %v568, 128
        %647 = vxpose.xlu0.b32.cont [10/16] %v573, 128
        %648 = vxpose.xlu0.b32.cont [11/16] %v578, 128
        %649 = vxpose.xlu0.b32.cont [12/16] %v583, 128
        %650 = vxpose.xlu0.b32.cont [13/16] %v588, 128
        %651 = vxpose.xlu0.b32.cont [14/16] %v593, 128
        %652 = vxpose.xlu0.b32.cont [15/16] %v598, 128
        %653 = vxpose.xlu0.b32.end [16/16] %v603, 128
        %v654 = vpop.trf.xlu0
        %v655 = vpop.trf.xlu0
        %v656 = vpop.trf.xlu0
        %v657 = vpop.trf.xlu0
        %v658 = vpop.trf.xlu0
        %v659 = vpop.trf.xlu0
        %v660 = vpop.trf.xlu0
        %v661 = vpop.trf.xlu0
        %v662 = vpop.trf.xlu0
        %v663 = vpop.trf.xlu0
        %v664 = vpop.trf.xlu0
        %v665 = vpop.trf.xlu0
        %v666 = vpop.trf.xlu0
        %v667 = vpop.trf.xlu0
        %v668 = vpop.trf.xlu0
        %v669 = vpop.trf.xlu0
        %v670 = vld [vmem:[#allocation7] sm:$0x7]
        %672 = vset.pattern.permute.xlu0 0
        %673 = vperm.xlu0 %672, %v670
        %v674 = vpop.permute.xlu0 %673
        %v676 = vadd.f32 %v622, %v674
        %v677 = vadd.f32 %v654, %v674
        %v680 = vcombine.low %v676, %v677
        %682 = vst [vmem:[%s211] sm:$0x77] %v680
        %s683 = sand.u32 %s97, 1
        %s684 = scalar_lea.sflag [#allocation4], %s683
        %s685 = sand.u32 %s97, 1
        %s686 = smul.addr %s685, 8
        %s687 = scalar_lea.vmem [#allocation8], %s686
        // Predicated region
        $region45: #{tpu_custom_call.1} parent=31 // pred_check
          %p688 = pneg %p107
        $region46: #{tpu_custom_call.1} parent=31 // pred_check_branch
          %690 = sbr.rel (%p688) target = $region48
        $region47: #{tpu_custom_call.1} parent=31 // pred_region
          %s692 = ssub.s32 128, 128
          %693 = vsyncadd %s684, %s692
          %s694 = smul.addr %s21, 2
          %s695 = smul.addr %s694, 64
          %s696 = scalar_lea.hbm %s3, %s695
          %s698 = sshll.u32 %s687, 4
          %s699 = int_to_ptr.vmem [resolvable:$true] %s698
          %701 = dma.vmem_to_hbm [thread:$0]  %s699, 128, %s696, %s684
        $region48: #{tpu_custom_call.1} parent=31 // pred_fallthru
          _
      $region32: #{tpu_custom_call.1} parent=5 // pred_fallthru
        _
      %p702 = scmp.le.s32.totalorder 2, %s16
      // Predicated region
      $region49: #{tpu_custom_call.1} parent=5 // pred_check
        %p703 = pneg %p702
      $region50: #{tpu_custom_call.1} parent=5 // pred_check_branch
        %705 = sbr.rel (%p703) target = $region52
      $region51: #{tpu_custom_call.1} parent=5 // pred_region
        %s706 = ssub.s32 %s16, 2
        // Predicated region
        $region53: #{tpu_custom_call.1} parent=51 // pred_check
          %p707 = pneg %p113
        $region54: #{tpu_custom_call.1} parent=51 // pred_check_branch
          %709 = sbr.rel (%p707) target = $region56
        $region55: #{tpu_custom_call.1} parent=51 // pred_region
          %s710 = sand.u32 %s98, 1
          %s711 = scalar_lea.sflag [#allocation4], %s710
          %s712 = sand.u32 %s98, 1
          %s713 = smul.addr %s712, 8
          %s714 = scalar_lea.vmem [#allocation8], %s713
          %715 = dma.done %s711, 128
        $region56: #{tpu_custom_call.1} parent=51 // pred_fallthru
          _
      $region52: #{tpu_custom_call.1} parent=5 // pred_fallthru
        _
    $region6: #{tpu_custom_call.1} parent=1 // loop_footer
      %s20 = sadd.s32 1, %s16
    $region7: #{tpu_custom_call.1} parent=1 // loop_footer_branch
      %15 = sbr.rel target = $region3
    $region8: #{tpu_custom_call.1} parent=1 // loop_exit
      _
    %716 = vsyncpa [#allocation3], 1
    %s717 = scalar_lea.sflag [#allocation3], 1
    %718 = vsyncpa %s717, 1
    %719 = vsyncpa [#allocation6], 1
    %720 = vsyncpa [#allocation4], 1
    %s721 = scalar_lea.sflag [#allocation4], 1
    %722 = vsyncpa %s721, 1

</llo_original>
